<compile_context>
chip_gen: v7x
topology: tpu7x:2x2x1
jax: 0.10.0
libtpu: 0.0.40
codegen_flags: <defaults>
</compile_context>

<pallas_src>
import functools
import math

import jax
import jax.numpy as jnp
from jax import lax
from jax.experimental import pallas as pl
from jax.experimental.pallas import tpu as pltpu

F32 = jnp.float32
BF16 = jnp.bfloat16
EPS = 1e-5
MASK_BIAS = 1e30  # (adj - 1) * MASK_BIAS: 0 on edges, -1e30 off-edges; exp() -> exact 0 in f32


# ----------------------------------------------------------------------------
# Fused Pallas kernel: one graph per grid step,
# num_layer x (GATConv + ReLU + BatchNorm), lane-dense per-layer feature output.
# ----------------------------------------------------------------------------
def _graph_convolution_kernel(dims, h_max, x_ref, adj_ref, *refs):
    """refs = [W_aug_0 .. W_aug_{L-1}, P, y_ref, attn_ref].

    W_aug_l : [F_l, H_l + 1] bf16, last column = W_l @ att_dst_l (folded dst term).
    P       : [L, 4, Hmax] f32 rows = (att_src, bias, bn_gamma, bn_beta).
    y_ref   : [L, N, Hmax]  per-layer features (jump concat done in the wrapper).
    attn_ref: [L, N, N]     dense attention (softmax rows over incoming edges).
    """
    num_layer = len(dims)
    w_refs = refs[:num_layer]
    p_ref = refs[num_layer]
    y_ref, attn_ref = refs[num_layer + 1], refs[num_layer + 2]

    adj = adj_ref[...]                       # [N, N] in {0,1}, self loops included
    neg = (adj - 1.0) * MASK_BIAS            # additive softmax mask, reused every layer
    h = x_ref[...]                           # [N, F_in], f32

    for l in range(num_layer):
        Hl = dims[l]
        pv = p_ref[l]                        # [4, Hmax]
        a_src = pv[0:1, :Hl]                 # [1, Hl]
        bias = pv[1:2, :Hl]
        gamma = pv[2:3, :Hl]
        beta = pv[3:4, :Hl]

        # [N, Hl+1] = h @ [W | W@att_dst] on the MXU (extra column is free at Hl << 128).
        hw_aug = jnp.dot(h.astype(BF16), w_refs[l][...],
                         preferred_element_type=F32)
        hw = hw_aug[:, :Hl]                                          # [N, Hl]
        adst_col = hw_aug[:, Hl:Hl + 1]                              # [N, 1] dst attention term
        # src term as a lane-dense [1, N] row via a transposed-rhs MXU contraction
        # (no in-kernel transpose, no 1-wide matmul output).
        asrc_row = lax.dot_general(a_src.astype(BF16), hw.astype(BF16),
                                   (((1,), (1,)), ((), ())),
                                   preferred_element_type=F32)       # [1, N]

        logits = adst_col + asrc_row                                 # [N, N]
        logits = jnp.maximum(logits, 0.2 * logits)                   # LeakyReLU(0.2)
        masked = logits + neg                                        # mask non-edges
        m = jnp.max(masked, axis=-1, keepdims=True)
        e = jnp.exp(masked - m)                                      # exact 0 on masked entries
        denom = jnp.sum(e, axis=-1, keepdims=True)
        # TODO(synk): approx=False if bit-parity with torch softmax is required.
        attn = e * pl.reciprocal(denom, approx=True)                 # softmax rows (EUP)

        out = jnp.dot(attn.astype(BF16), hw.astype(BF16),
                      preferred_element_type=F32) + bias             # aggregate + bias
        out = jnp.maximum(out, 0.0)                                  # ReLU
        mu = jnp.mean(out, axis=0, keepdims=True)                    # BatchNorm (train mode)
        var = jnp.mean((out - mu) * (out - mu), axis=0, keepdims=True)
        scale = gamma * lax.rsqrt(var + EPS)                         # [1, Hl]
        shift = beta - mu * scale
        h = out * scale + shift

        if Hl == h_max:
            y_ref[l] = h                                             # lane-dense, offset-0 store
        else:
            y_ref[l, :, :Hl] = h
        attn_ref[l] = attn


def graph_convolution_apply(dims, h_max, w_aug, P, x_b, adj_b):
    """Batched pallas_call: grid over graphs, params DMA'd once (constant index map)."""
    B, N, f_in = x_b.shape
    L = len(dims)

    in_specs = [
        pl.BlockSpec((None, N, f_in), lambda b: (b, 0, 0)),
        pl.BlockSpec((None, N, N), lambda b: (b, 0, 0)),
    ]
    for w in w_aug:
        in_specs.append(pl.BlockSpec(w.shape, lambda b: (0, 0)))
    in_specs.append(pl.BlockSpec(P.shape, lambda b: (0, 0, 0)))

    out_specs = (
        pl.BlockSpec((None, L, N, h_max), lambda b: (b, 0, 0, 0)),
        pl.BlockSpec((None, L, N, N), lambda b: (b, 0, 0, 0)),
    )

    kernel = functools.partial(_graph_convolution_kernel, dims, h_max)
    y, attn = pl.pallas_call(
        kernel,
        grid=(B,),
        out_shape=(jax.ShapeDtypeStruct((B, L, N, h_max), F32),
                   jax.ShapeDtypeStruct((B, L, N, N), F32)),
        in_specs=in_specs,
        out_specs=out_specs,
        compiler_params=pltpu.CompilerParams(dimension_semantics=("parallel",)),
    )(x_b, adj_b, *w_aug, P)
    return y, attn


# ----------------------------------------------------------------------------
# Forward (mirrors GraphConvolution.forward with jump=True, batch_norm=True),
# batched over independent graphs.
# ----------------------------------------------------------------------------
def _prep_params(params):
    """Fold att_dst into W (W_aug = [W | W@att_dst], bf16) and pack the small
    per-layer vectors into one [L, 4, Hmax] array.  Fuses under jax.jit."""
    dims = tuple(int(p['W'].shape[1]) for p in params)
    h_max = max(dims)
    w_aug, rows = [], []
    for p in params:
        W = p['W'].astype(F32)
        wad = W @ p['att_dst'].astype(F32)                       # [F_in]
        w_aug.append(jnp.concatenate([W, wad[:, None]], axis=1).astype(BF16))
        row = jnp.stack([p['att_src'], p['bias'],
                         p['bn_gamma'], p['bn_beta']]).astype(F32)  # [4, Hl]
        rows.append(jnp.pad(row, ((0, 0), (0, h_max - row.shape[1]))))
    return dims, h_max, w_aug, jnp.stack(rows)                   # P: [L, 4, Hmax]


@jax.jit
def graph_convolution_forward(params, x, edge_index):
    """x: [B, N, F] f32, edge_index: [B, 2, E] int (src, dst), no self loops needed.

    Returns (x_jump [B, N, sum(H_l)],
             (edge_index_with_self_loops [B, 2, E+N], alpha [B, L, E+N]),
             attn_dense [B, L, N, N]).
    Equivalent to applying the torch module to each graph independently
    (BatchNorm statistics are per graph, matching the single-graph forward).
    """
    B, N, _ = x.shape
    dims, h_max, w_aug, P = _prep_params(params)
    L = len(dims)

    def build_adj(ei):
        src, dst = ei[0], ei[1]
        adj = jnp.zeros((N, N), F32).at[dst, src].set(1.0)       # adj[i=dst, j=src]
        eye = jnp.eye(N, dtype=F32)
        return adj * (1.0 - eye) + eye                           # GATConv: remove + add self loops

    adj_b = jax.vmap(build_adj)(edge_index)

    y, attn_dense = graph_convolution_apply(dims, h_max, w_aug, P, x, adj_b)

    # Jump concat (free layout plumbing in the wrapper; kernel stores stay lane-dense).
    x_jump = jnp.concatenate([y[:, l, :, :dims[l]] for l in range(L)], axis=-1)

    # return_attention_weights=True: alphas on the input edges + appended self loops.
    loops = jnp.arange(N, dtype=edge_index.dtype)
    loops = jnp.broadcast_to(jnp.stack([loops, loops])[None], (B, 2, N))
    ei_full = jnp.concatenate([edge_index, loops], axis=2)                    # [B, 2, E+N]
    alpha = jax.vmap(lambda a, ei: a[:, ei[1], ei[0]])(attn_dense, ei_full)   # [B, L, E+N]
    return x_jump, (ei_full, alpha), attn_dense


# ----------------------------------------------------------------------------
# Parameters (deterministic synthetic init; shapes follow the torch module)
# ----------------------------------------------------------------------------
def init_params(key, in_channels, hidden_channels, out_channels, num_layer=3):
    layers = []
    for l in range(num_layer):
        fin = in_channels if l == 0 else hidden_channels
        fout = hidden_channels if l != num_layer - 1 else out_channels
        key, k1, k2, k3 = jax.random.split(key, 4)
        layers.append(dict(
            W=jax.random.normal(k1, (fin, fout), F32) / math.sqrt(fin),
            att_src=jax.random.normal(k2, (fout,), F32) * 0.1,
            att_dst=jax.random.normal(k3, (fout,), F32) * 0.1,
            bias=jnp.zeros((fout,), F32),
            bn_gamma=jnp.ones((fout,), F32),
            bn_beta=jnp.zeros((fout,), F32),
        ))
    return layers


# ----------------------------------------------------------------------------
if __name__ == "__main__":
    key = jax.random.PRNGKey(0)
    B = 8                      # batch of graphs (grid axis, "parallel")
    N = 16
    in_channels, hidden, out_channels = 8, 8, 8
    num_layer = 3

    kx, kp = jax.random.split(key)
    x = jax.random.normal(kx, (B, N, in_channels), F32)

    # deterministic edges per graph: ring + chord, both directions, no self loops
    edges = []
    for i in range(N):
        for d in (1, 3):
            j = (i + d) % N
            edges += [(i, j), (j, i)]
    edge_index = jnp.array(edges, dtype=jnp.int32).T                # [2, E], E = 64
    E = edge_index.shape[1]
    edge_index_b = jnp.broadcast_to(edge_index[None], (B, 2, E))

    params = init_params(kp, in_channels, hidden, out_channels, num_layer)

    y, (ei_full, alpha), attn_dense = graph_convolution_forward(params, x, edge_index_b)
    jax.block_until_ready(y)
    jax.block_until_ready(alpha)
    jax.block_until_ready(attn_dense)

    assert y.shape == (B, N, 2 * hidden + out_channels)
    assert attn_dense.shape == (B, num_layer, N, N)
    assert ei_full.shape == (B, 2, E + N)
    assert alpha.shape == (B, num_layer, E + N)
    assert bool(jnp.all(jnp.isfinite(y)))
    assert bool(jnp.all(jnp.isfinite(alpha)))
    # each row of each attention matrix is a softmax over incoming edges
    row_err = jnp.max(jnp.abs(attn_dense.sum(axis=-1) - 1.0))
    assert bool(row_err < 1e-2)
    print("KERNEL_OK")
</pallas_src>

<mosaic_0001>
module attributes {stable_mosaic.version = 11 : i64} {
  func.func @_graph_convolution_kernel(%arg0: i32, %arg1: memref<1x16x8xf32, #tpu.memory_space<vmem>>, %arg2: memref<1x16x16xf32, #tpu.memory_space<vmem>>, %arg3: memref<8x9xbf16, #tpu.memory_space<vmem>>, %arg4: memref<8x9xbf16, #tpu.memory_space<vmem>>, %arg5: memref<8x9xbf16, #tpu.memory_space<vmem>>, %arg6: memref<3x4x8xf32, #tpu.memory_space<vmem>>, %arg7: memref<1x3x16x8xf32, #tpu.memory_space<vmem>>, %arg8: memref<1x3x16x16xf32, #tpu.memory_space<vmem>>) attributes {dimension_semantics = [#tpu.dimension_semantics<parallel>], iteration_bounds = array<i64: 8>, scalar_prefetch = 0 : i64, scratch_operands = 0 : i64, tpu.core_type = #tpu.core_type<tc>, window_params = [{transform_indices = @transform_0, window_bounds = array<i64: 1, 16, 8>}, {transform_indices = @transform_1, window_bounds = array<i64: 1, 16, 16>}, {pipeline_mode = #tpu.pipeline_mode<synchronous>, transform_indices = @transform_2, window_bounds = array<i64: 8, 9>}, {pipeline_mode = #tpu.pipeline_mode<synchronous>, transform_indices = @transform_3, window_bounds = array<i64: 8, 9>}, {pipeline_mode = #tpu.pipeline_mode<synchronous>, transform_indices = @transform_4, window_bounds = array<i64: 8, 9>}, {pipeline_mode = #tpu.pipeline_mode<synchronous>, transform_indices = @transform_5, window_bounds = array<i64: 3, 4, 8>}, {transform_indices = @transform_6, window_bounds = array<i64: 1, 3, 16, 8>}, {transform_indices = @transform_7, window_bounds = array<i64: 1, 3, 16, 16>}]} {
    %c0 = arith.constant 0 : index
    %c0_0 = arith.constant 0 : index
    %c0_1 = arith.constant 0 : index
    %0 = vector.load %arg2[%c0, %c0_0, %c0_1] : memref<1x16x16xf32, #tpu.memory_space<vmem>>, vector<1x16x16xf32>
    %1 = vector.shape_cast %0 : vector<1x16x16xf32> to vector<16x16xf32>
    %cst = arith.constant 1.000000e+00 : f32
    %2 = vector.broadcast %cst : f32 to vector<16x16xf32>
    %3 = arith.subf %1, %2 : vector<16x16xf32>
    %cst_2 = arith.constant 1.000000e+30 : f32
    %4 = vector.broadcast %cst_2 : f32 to vector<16x16xf32>
    %5 = arith.mulf %3, %4 : vector<16x16xf32>
    %c0_3 = arith.constant 0 : index
    %c0_4 = arith.constant 0 : index
    %c0_5 = arith.constant 0 : index
    %6 = vector.load %arg1[%c0_3, %c0_4, %c0_5] : memref<1x16x8xf32, #tpu.memory_space<vmem>>, vector<1x16x8xf32>
    %7 = vector.shape_cast %6 : vector<1x16x8xf32> to vector<16x8xf32>
    %c0_6 = arith.constant 0 : index
    %c0_7 = arith.constant 0 : index
    %c0_8 = arith.constant 0 : index
    %8 = vector.load %arg6[%c0_6, %c0_7, %c0_8] : memref<3x4x8xf32, #tpu.memory_space<vmem>>, vector<1x4x8xf32>
    %9 = vector.shape_cast %8 : vector<1x4x8xf32> to vector<4x8xf32>
    %10 = vector.extract_strided_slice %9 {offsets = [0, 0], sizes = [1, 8], strides = [1, 1]} : vector<4x8xf32> to vector<1x8xf32>
    %11 = vector.extract_strided_slice %9 {offsets = [1, 0], sizes = [1, 8], strides = [1, 1]} : vector<4x8xf32> to vector<1x8xf32>
    %12 = vector.extract_strided_slice %9 {offsets = [2, 0], sizes = [1, 8], strides = [1, 1]} : vector<4x8xf32> to vector<1x8xf32>
    %13 = vector.extract_strided_slice %9 {offsets = [3, 0], sizes = [1, 8], strides = [1, 1]} : vector<4x8xf32> to vector<1x8xf32>
    %14 = arith.truncf %7 : vector<16x8xf32> to vector<16x8xbf16>
    %c0_9 = arith.constant 0 : index
    %c0_10 = arith.constant 0 : index
    %15 = vector.load %arg3[%c0_9, %c0_10] : memref<8x9xbf16, #tpu.memory_space<vmem>>, vector<8x9xbf16>
    %cst_11 = arith.constant dense<0.000000e+00> : vector<16x9xf32>
    %16 = tpu.matmul %14, %15, %cst_11 {dimension_numbers = #tpu.dot_dimension_numbers<[1], [0], [0], [1], [0, 0, 1, 1], [], []>} : vector<16x8xbf16>, vector<8x9xbf16>, vector<16x9xf32> -> vector<16x9xf32>
    %17 = vector.extract_strided_slice %16 {offsets = [0, 0], sizes = [16, 8], strides = [1, 1]} : vector<16x9xf32> to vector<16x8xf32>
    %18 = vector.extract_strided_slice %16 {offsets = [0, 8], sizes = [16, 1], strides = [1, 1]} : vector<16x9xf32> to vector<16x1xf32>
    %19 = arith.truncf %10 : vector<1x8xf32> to vector<1x8xbf16>
    %20 = arith.truncf %17 : vector<16x8xf32> to vector<16x8xbf16>
    %cst_12 = arith.constant dense<0.000000e+00> : vector<1x16xf32>
    %21 = tpu.matmul %19, %20, %cst_12 {dimension_numbers = #tpu.dot_dimension_numbers<[1], [1], [0], [0], [0, 0, 1, 0], [], []>} : vector<1x8xbf16>, vector<16x8xbf16>, vector<1x16xf32> -> vector<1x16xf32>
    %22 = vector.broadcast %18 : vector<16x1xf32> to vector<16x16xf32>
    %23 = vector.broadcast %21 : vector<1x16xf32> to vector<16x16xf32>
    %24 = arith.addf %22, %23 : vector<16x16xf32>
    %cst_13 = arith.constant 2.000000e-01 : f32
    %25 = vector.broadcast %cst_13 : f32 to vector<16x16xf32>
    %26 = arith.mulf %25, %24 : vector<16x16xf32>
    %27 = arith.maximumf %24, %26 : vector<16x16xf32>
    %28 = arith.addf %27, %5 : vector<16x16xf32>
    %cst_14 = arith.constant dense<0xFF800000> : vector<16xf32>
    %29 = vector.multi_reduction <maximumf>, %28, %cst_14 [1] : vector<16x16xf32> to vector<16xf32>
    %30 = vector.shape_cast %29 : vector<16xf32> to vector<16x1xf32>
    %31 = vector.broadcast %30 : vector<16x1xf32> to vector<16x16xf32>
    %32 = arith.subf %28, %31 : vector<16x16xf32>
    %33 = math.exp %32 : vector<16x16xf32>
    %cst_15 = arith.constant dense<0.000000e+00> : vector<16xf32>
    %34 = vector.multi_reduction <add>, %33, %cst_15 [1] : vector<16x16xf32> to vector<16xf32>
    %35 = vector.shape_cast %34 : vector<16xf32> to vector<16x1xf32>
    %36 = tpu.reciprocal %35 {approx = true} : vector<16x1xf32> -> vector<16x1xf32>
    %37 = vector.broadcast %36 : vector<16x1xf32> to vector<16x16xf32>
    %38 = arith.mulf %33, %37 : vector<16x16xf32>
    %39 = arith.truncf %38 : vector<16x16xf32> to vector<16x16xbf16>
    %40 = arith.truncf %17 : vector<16x8xf32> to vector<16x8xbf16>
    %cst_16 = arith.constant dense<0.000000e+00> : vector<16x8xf32>
    %41 = tpu.matmul %39, %40, %cst_16 {dimension_numbers = #tpu.dot_dimension_numbers<[1], [0], [0], [1], [0, 0, 1, 1], [], []>} : vector<16x16xbf16>, vector<16x8xbf16>, vector<16x8xf32> -> vector<16x8xf32>
    %42 = vector.broadcast %11 : vector<1x8xf32> to vector<16x8xf32>
    %43 = arith.addf %41, %42 : vector<16x8xf32>
    %cst_17 = arith.constant 0.000000e+00 : f32
    %44 = vector.broadcast %cst_17 : f32 to vector<16x8xf32>
    %45 = arith.maximumf %43, %44 : vector<16x8xf32>
    %cst_18 = arith.constant dense<0.000000e+00> : vector<8xf32>
    %46 = vector.multi_reduction <add>, %45, %cst_18 [0] : vector<16x8xf32> to vector<8xf32>
    %47 = vector.shape_cast %46 : vector<8xf32> to vector<1x8xf32>
    %cst_19 = arith.constant 1.600000e+01 : f32
    %48 = vector.broadcast %cst_19 : f32 to vector<1x8xf32>
    %49 = arith.divf %47, %48 : vector<1x8xf32>
    %50 = vector.broadcast %49 : vector<1x8xf32> to vector<16x8xf32>
    %51 = arith.subf %45, %50 : vector<16x8xf32>
    %52 = vector.broadcast %49 : vector<1x8xf32> to vector<16x8xf32>
    %53 = arith.subf %45, %52 : vector<16x8xf32>
    %54 = arith.mulf %51, %53 : vector<16x8xf32>
    %cst_20 = arith.constant dense<0.000000e+00> : vector<8xf32>
    %55 = vector.multi_reduction <add>, %54, %cst_20 [0] : vector<16x8xf32> to vector<8xf32>
    %56 = vector.shape_cast %55 : vector<8xf32> to vector<1x8xf32>
    %cst_21 = arith.constant 1.600000e+01 : f32
    %57 = vector.broadcast %cst_21 : f32 to vector<1x8xf32>
    %58 = arith.divf %56, %57 : vector<1x8xf32>
    %cst_22 = arith.constant 9.99999974E-6 : f32
    %59 = vector.broadcast %cst_22 : f32 to vector<1x8xf32>
    %60 = arith.addf %58, %59 : vector<1x8xf32>
    %61 = math.rsqrt %60 : vector<1x8xf32>
    %62 = arith.mulf %12, %61 : vector<1x8xf32>
    %63 = arith.mulf %49, %62 : vector<1x8xf32>
    %64 = arith.subf %13, %63 : vector<1x8xf32>
    %65 = vector.broadcast %62 : vector<1x8xf32> to vector<16x8xf32>
    %66 = arith.mulf %45, %65 : vector<16x8xf32>
    %67 = vector.broadcast %64 : vector<1x8xf32> to vector<16x8xf32>
    %68 = arith.addf %66, %67 : vector<16x8xf32>
    %c0_23 = arith.constant 0 : index
    %c0_24 = arith.constant 0 : index
    %c0_25 = arith.constant 0 : index
    %c0_26 = arith.constant 0 : index
    %69 = vector.load %arg7[%c0_23, %c0_24, %c0_25, %c0_26] : memref<1x3x16x8xf32, #tpu.memory_space<vmem>>, vector<1x1x16x8xf32>
    %70 = vector.shape_cast %69 : vector<1x1x16x8xf32> to vector<16x8xf32>
    %71 = vector.shape_cast %68 : vector<16x8xf32> to vector<1x1x16x8xf32>
    tpu.vector_store %arg7[%c0_23, %c0_24, %c0_25, %c0_26], %71 {strides = array<i32>} : memref<1x3x16x8xf32, #tpu.memory_space<vmem>>, vector<1x1x16x8xf32>,
    %c0_27 = arith.constant 0 : index
    %c0_28 = arith.constant 0 : index
    %c0_29 = arith.constant 0 : index
    %c0_30 = arith.constant 0 : index
    %72 = vector.load %arg8[%c0_27, %c0_28, %c0_29, %c0_30] : memref<1x3x16x16xf32, #tpu.memory_space<vmem>>, vector<1x1x16x16xf32>
    %73 = vector.shape_cast %72 : vector<1x1x16x16xf32> to vector<16x16xf32>
    %74 = vector.shape_cast %38 : vector<16x16xf32> to vector<1x1x16x16xf32>
    tpu.vector_store %arg8[%c0_27, %c0_28, %c0_29, %c0_30], %74 {strides = array<i32>} : memref<1x3x16x16xf32, #tpu.memory_space<vmem>>, vector<1x1x16x16xf32>,
    %c1 = arith.constant 1 : index
    %c0_31 = arith.constant 0 : index
    %c0_32 = arith.constant 0 : index
    %75 = vector.load %arg6[%c1, %c0_31, %c0_32] : memref<3x4x8xf32, #tpu.memory_space<vmem>>, vector<1x4x8xf32>
    %76 = vector.shape_cast %75 : vector<1x4x8xf32> to vector<4x8xf32>
    %77 = vector.extract_strided_slice %76 {offsets = [0, 0], sizes = [1, 8], strides = [1, 1]} : vector<4x8xf32> to vector<1x8xf32>
    %78 = vector.extract_strided_slice %76 {offsets = [1, 0], sizes = [1, 8], strides = [1, 1]} : vector<4x8xf32> to vector<1x8xf32>
    %79 = vector.extract_strided_slice %76 {offsets = [2, 0], sizes = [1, 8], strides = [1, 1]} : vector<4x8xf32> to vector<1x8xf32>
    %80 = vector.extract_strided_slice %76 {offsets = [3, 0], sizes = [1, 8], strides = [1, 1]} : vector<4x8xf32> to vector<1x8xf32>
    %81 = arith.truncf %68 : vector<16x8xf32> to vector<16x8xbf16>
    %c0_33 = arith.constant 0 : index
    %c0_34 = arith.constant 0 : index
    %82 = vector.load %arg4[%c0_33, %c0_34] : memref<8x9xbf16, #tpu.memory_space<vmem>>, vector<8x9xbf16>
    %cst_35 = arith.constant dense<0.000000e+00> : vector<16x9xf32>
    %83 = tpu.matmul %81, %82, %cst_35 {dimension_numbers = #tpu.dot_dimension_numbers<[1], [0], [0], [1], [0, 0, 1, 1], [], []>} : vector<16x8xbf16>, vector<8x9xbf16>, vector<16x9xf32> -> vector<16x9xf32>
    %84 = vector.extract_strided_slice %83 {offsets = [0, 0], sizes = [16, 8], strides = [1, 1]} : vector<16x9xf32> to vector<16x8xf32>
    %85 = vector.extract_strided_slice %83 {offsets = [0, 8], sizes = [16, 1], strides = [1, 1]} : vector<16x9xf32> to vector<16x1xf32>
    %86 = arith.truncf %77 : vector<1x8xf32> to vector<1x8xbf16>
    %87 = arith.truncf %84 : vector<16x8xf32> to vector<16x8xbf16>
    %cst_36 = arith.constant dense<0.000000e+00> : vector<1x16xf32>
    %88 = tpu.matmul %86, %87, %cst_36 {dimension_numbers = #tpu.dot_dimension_numbers<[1], [1], [0], [0], [0, 0, 1, 0], [], []>} : vector<1x8xbf16>, vector<16x8xbf16>, vector<1x16xf32> -> vector<1x16xf32>
    %89 = vector.broadcast %85 : vector<16x1xf32> to vector<16x16xf32>
    %90 = vector.broadcast %88 : vector<1x16xf32> to vector<16x16xf32>
    %91 = arith.addf %89, %90 : vector<16x16xf32>
    %cst_37 = arith.constant 2.000000e-01 : f32
    %92 = vector.broadcast %cst_37 : f32 to vector<16x16xf32>
    %93 = arith.mulf %92, %91 : vector<16x16xf32>
    %94 = arith.maximumf %91, %93 : vector<16x16xf32>
    %95 = arith.addf %94, %5 : vector<16x16xf32>
    %cst_38 = arith.constant dense<0xFF800000> : vector<16xf32>
    %96 = vector.multi_reduction <maximumf>, %95, %cst_38 [1] : vector<16x16xf32> to vector<16xf32>
    %97 = vector.shape_cast %96 : vector<16xf32> to vector<16x1xf32>
    %98 = vector.broadcast %97 : vector<16x1xf32> to vector<16x16xf32>
    %99 = arith.subf %95, %98 : vector<16x16xf32>
    %100 = math.exp %99 : vector<16x16xf32>
    %cst_39 = arith.constant dense<0.000000e+00> : vector<16xf32>
    %101 = vector.multi_reduction <add>, %100, %cst_39 [1] : vector<16x16xf32> to vector<16xf32>
    %102 = vector.shape_cast %101 : vector<16xf32> to vector<16x1xf32>
    %103 = tpu.reciprocal %102 {approx = true} : vector<16x1xf32> -> vector<16x1xf32>
    %104 = vector.broadcast %103 : vector<16x1xf32> to vector<16x16xf32>
    %105 = arith.mulf %100, %104 : vector<16x16xf32>
    %106 = arith.truncf %105 : vector<16x16xf32> to vector<16x16xbf16>
    %107 = arith.truncf %84 : vector<16x8xf32> to vector<16x8xbf16>
    %cst_40 = arith.constant dense<0.000000e+00> : vector<16x8xf32>
    %108 = tpu.matmul %106, %107, %cst_40 {dimension_numbers = #tpu.dot_dimension_numbers<[1], [0], [0], [1], [0, 0, 1, 1], [], []>} : vector<16x16xbf16>, vector<16x8xbf16>, vector<16x8xf32> -> vector<16x8xf32>
    %109 = vector.broadcast %78 : vector<1x8xf32> to vector<16x8xf32>
    %110 = arith.addf %108, %109 : vector<16x8xf32>
    %cst_41 = arith.constant 0.000000e+00 : f32
    %111 = vector.broadcast %cst_41 : f32 to vector<16x8xf32>
    %112 = arith.maximumf %110, %111 : vector<16x8xf32>
    %cst_42 = arith.constant dense<0.000000e+00> : vector<8xf32>
    %113 = vector.multi_reduction <add>, %112, %cst_42 [0] : vector<16x8xf32> to vector<8xf32>
    %114 = vector.shape_cast %113 : vector<8xf32> to vector<1x8xf32>
    %cst_43 = arith.constant 1.600000e+01 : f32
    %115 = vector.broadcast %cst_43 : f32 to vector<1x8xf32>
    %116 = arith.divf %114, %115 : vector<1x8xf32>
    %117 = vector.broadcast %116 : vector<1x8xf32> to vector<16x8xf32>
    %118 = arith.subf %112, %117 : vector<16x8xf32>
    %119 = vector.broadcast %116 : vector<1x8xf32> to vector<16x8xf32>
    %120 = arith.subf %112, %119 : vector<16x8xf32>
    %121 = arith.mulf %118, %120 : vector<16x8xf32>
    %cst_44 = arith.constant dense<0.000000e+00> : vector<8xf32>
    %122 = vector.multi_reduction <add>, %121, %cst_44 [0] : vector<16x8xf32> to vector<8xf32>
    %123 = vector.shape_cast %122 : vector<8xf32> to vector<1x8xf32>
    %cst_45 = arith.constant 1.600000e+01 : f32
    %124 = vector.broadcast %cst_45 : f32 to vector<1x8xf32>
    %125 = arith.divf %123, %124 : vector<1x8xf32>
    %cst_46 = arith.constant 9.99999974E-6 : f32
    %126 = vector.broadcast %cst_46 : f32 to vector<1x8xf32>
    %127 = arith.addf %125, %126 : vector<1x8xf32>
    %128 = math.rsqrt %127 : vector<1x8xf32>
    %129 = arith.mulf %79, %128 : vector<1x8xf32>
    %130 = arith.mulf %116, %129 : vector<1x8xf32>
    %131 = arith.subf %80, %130 : vector<1x8xf32>
    %132 = vector.broadcast %129 : vector<1x8xf32> to vector<16x8xf32>
    %133 = arith.mulf %112, %132 : vector<16x8xf32>
    %134 = vector.broadcast %131 : vector<1x8xf32> to vector<16x8xf32>
    %135 = arith.addf %133, %134 : vector<16x8xf32>
    %c0_47 = arith.constant 0 : index
    %c1_48 = arith.constant 1 : index
    %c0_49 = arith.constant 0 : index
    %c0_50 = arith.constant 0 : index
    %136 = vector.load %arg7[%c0_47, %c1_48, %c0_49, %c0_50] : memref<1x3x16x8xf32, #tpu.memory_space<vmem>>, vector<1x1x16x8xf32>
    %137 = vector.shape_cast %136 : vector<1x1x16x8xf32> to vector<16x8xf32>
    %138 = vector.shape_cast %135 : vector<16x8xf32> to vector<1x1x16x8xf32>
    tpu.vector_store %arg7[%c0_47, %c1_48, %c0_49, %c0_50], %138 {strides = array<i32>} : memref<1x3x16x8xf32, #tpu.memory_space<vmem>>, vector<1x1x16x8xf32>,
    %c0_51 = arith.constant 0 : index
    %c1_52 = arith.constant 1 : index
    %c0_53 = arith.constant 0 : index
    %c0_54 = arith.constant 0 : index
    %139 = vector.load %arg8[%c0_51, %c1_52, %c0_53, %c0_54] : memref<1x3x16x16xf32, #tpu.memory_space<vmem>>, vector<1x1x16x16xf32>
    %140 = vector.shape_cast %139 : vector<1x1x16x16xf32> to vector<16x16xf32>
    %141 = vector.shape_cast %105 : vector<16x16xf32> to vector<1x1x16x16xf32>
    tpu.vector_store %arg8[%c0_51, %c1_52, %c0_53, %c0_54], %141 {strides = array<i32>} : memref<1x3x16x16xf32, #tpu.memory_space<vmem>>, vector<1x1x16x16xf32>,
    %c2 = arith.constant 2 : index
    %c0_55 = arith.constant 0 : index
    %c0_56 = arith.constant 0 : index
    %142 = vector.load %arg6[%c2, %c0_55, %c0_56] : memref<3x4x8xf32, #tpu.memory_space<vmem>>, vector<1x4x8xf32>
    %143 = vector.shape_cast %142 : vector<1x4x8xf32> to vector<4x8xf32>
    %144 = vector.extract_strided_slice %143 {offsets = [0, 0], sizes = [1, 8], strides = [1, 1]} : vector<4x8xf32> to vector<1x8xf32>
    %145 = vector.extract_strided_slice %143 {offsets = [1, 0], sizes = [1, 8], strides = [1, 1]} : vector<4x8xf32> to vector<1x8xf32>
    %146 = vector.extract_strided_slice %143 {offsets = [2, 0], sizes = [1, 8], strides = [1, 1]} : vector<4x8xf32> to vector<1x8xf32>
    %147 = vector.extract_strided_slice %143 {offsets = [3, 0], sizes = [1, 8], strides = [1, 1]} : vector<4x8xf32> to vector<1x8xf32>
    %148 = arith.truncf %135 : vector<16x8xf32> to vector<16x8xbf16>
    %c0_57 = arith.constant 0 : index
    %c0_58 = arith.constant 0 : index
    %149 = vector.load %arg5[%c0_57, %c0_58] : memref<8x9xbf16, #tpu.memory_space<vmem>>, vector<8x9xbf16>
    %cst_59 = arith.constant dense<0.000000e+00> : vector<16x9xf32>
    %150 = tpu.matmul %148, %149, %cst_59 {dimension_numbers = #tpu.dot_dimension_numbers<[1], [0], [0], [1], [0, 0, 1, 1], [], []>} : vector<16x8xbf16>, vector<8x9xbf16>, vector<16x9xf32> -> vector<16x9xf32>
    %151 = vector.extract_strided_slice %150 {offsets = [0, 0], sizes = [16, 8], strides = [1, 1]} : vector<16x9xf32> to vector<16x8xf32>
    %152 = vector.extract_strided_slice %150 {offsets = [0, 8], sizes = [16, 1], strides = [1, 1]} : vector<16x9xf32> to vector<16x1xf32>
    %153 = arith.truncf %144 : vector<1x8xf32> to vector<1x8xbf16>
    %154 = arith.truncf %151 : vector<16x8xf32> to vector<16x8xbf16>
    %cst_60 = arith.constant dense<0.000000e+00> : vector<1x16xf32>
    %155 = tpu.matmul %153, %154, %cst_60 {dimension_numbers = #tpu.dot_dimension_numbers<[1], [1], [0], [0], [0, 0, 1, 0], [], []>} : vector<1x8xbf16>, vector<16x8xbf16>, vector<1x16xf32> -> vector<1x16xf32>
    %156 = vector.broadcast %152 : vector<16x1xf32> to vector<16x16xf32>
    %157 = vector.broadcast %155 : vector<1x16xf32> to vector<16x16xf32>
    %158 = arith.addf %156, %157 : vector<16x16xf32>
    %cst_61 = arith.constant 2.000000e-01 : f32
    %159 = vector.broadcast %cst_61 : f32 to vector<16x16xf32>
    %160 = arith.mulf %159, %158 : vector<16x16xf32>
    %161 = arith.maximumf %158, %160 : vector<16x16xf32>
    %162 = arith.addf %161, %5 : vector<16x16xf32>
    %cst_62 = arith.constant dense<0xFF800000> : vector<16xf32>
    %163 = vector.multi_reduction <maximumf>, %162, %cst_62 [1] : vector<16x16xf32> to vector<16xf32>
    %164 = vector.shape_cast %163 : vector<16xf32> to vector<16x1xf32>
    %165 = vector.broadcast %164 : vector<16x1xf32> to vector<16x16xf32>
    %166 = arith.subf %162, %165 : vector<16x16xf32>
    %167 = math.exp %166 : vector<16x16xf32>
    %cst_63 = arith.constant dense<0.000000e+00> : vector<16xf32>
    %168 = vector.multi_reduction <add>, %167, %cst_63 [1] : vector<16x16xf32> to vector<16xf32>
    %169 = vector.shape_cast %168 : vector<16xf32> to vector<16x1xf32>
    %170 = tpu.reciprocal %169 {approx = true} : vector<16x1xf32> -> vector<16x1xf32>
    %171 = vector.broadcast %170 : vector<16x1xf32> to vector<16x16xf32>
    %172 = arith.mulf %167, %171 : vector<16x16xf32>
    %173 = arith.truncf %172 : vector<16x16xf32> to vector<16x16xbf16>
    %174 = arith.truncf %151 : vector<16x8xf32> to vector<16x8xbf16>
    %cst_64 = arith.constant dense<0.000000e+00> : vector<16x8xf32>
    %175 = tpu.matmul %173, %174, %cst_64 {dimension_numbers = #tpu.dot_dimension_numbers<[1], [0], [0], [1], [0, 0, 1, 1], [], []>} : vector<16x16xbf16>, vector<16x8xbf16>, vector<16x8xf32> -> vector<16x8xf32>
    %176 = vector.broadcast %145 : vector<1x8xf32> to vector<16x8xf32>
    %177 = arith.addf %175, %176 : vector<16x8xf32>
    %cst_65 = arith.constant 0.000000e+00 : f32
    %178 = vector.broadcast %cst_65 : f32 to vector<16x8xf32>
    %179 = arith.maximumf %177, %178 : vector<16x8xf32>
    %cst_66 = arith.constant dense<0.000000e+00> : vector<8xf32>
    %180 = vector.multi_reduction <add>, %179, %cst_66 [0] : vector<16x8xf32> to vector<8xf32>
    %181 = vector.shape_cast %180 : vector<8xf32> to vector<1x8xf32>
    %cst_67 = arith.constant 1.600000e+01 : f32
    %182 = vector.broadcast %cst_67 : f32 to vector<1x8xf32>
    %183 = arith.divf %181, %182 : vector<1x8xf32>
    %184 = vector.broadcast %183 : vector<1x8xf32> to vector<16x8xf32>
    %185 = arith.subf %179, %184 : vector<16x8xf32>
    %186 = vector.broadcast %183 : vector<1x8xf32> to vector<16x8xf32>
    %187 = arith.subf %179, %186 : vector<16x8xf32>
    %188 = arith.mulf %185, %187 : vector<16x8xf32>
    %cst_68 = arith.constant dense<0.000000e+00> : vector<8xf32>
    %189 = vector.multi_reduction <add>, %188, %cst_68 [0] : vector<16x8xf32> to vector<8xf32>
    %190 = vector.shape_cast %189 : vector<8xf32> to vector<1x8xf32>
    %cst_69 = arith.constant 1.600000e+01 : f32
    %191 = vector.broadcast %cst_69 : f32 to vector<1x8xf32>
    %192 = arith.divf %190, %191 : vector<1x8xf32>
    %cst_70 = arith.constant 9.99999974E-6 : f32
    %193 = vector.broadcast %cst_70 : f32 to vector<1x8xf32>
    %194 = arith.addf %192, %193 : vector<1x8xf32>
    %195 = math.rsqrt %194 : vector<1x8xf32>
    %196 = arith.mulf %146, %195 : vector<1x8xf32>
    %197 = arith.mulf %183, %196 : vector<1x8xf32>
    %198 = arith.subf %147, %197 : vector<1x8xf32>
    %199 = vector.broadcast %196 : vector<1x8xf32> to vector<16x8xf32>
    %200 = arith.mulf %179, %199 : vector<16x8xf32>
    %201 = vector.broadcast %198 : vector<1x8xf32> to vector<16x8xf32>
    %202 = arith.addf %200, %201 : vector<16x8xf32>
    %c0_71 = arith.constant 0 : index
    %c2_72 = arith.constant 2 : index
    %c0_73 = arith.constant 0 : index
    %c0_74 = arith.constant 0 : index
    %203 = vector.load %arg7[%c0_71, %c2_72, %c0_73, %c0_74] : memref<1x3x16x8xf32, #tpu.memory_space<vmem>>, vector<1x1x16x8xf32>
    %204 = vector.shape_cast %203 : vector<1x1x16x8xf32> to vector<16x8xf32>
    %205 = vector.shape_cast %202 : vector<16x8xf32> to vector<1x1x16x8xf32>
    tpu.vector_store %arg7[%c0_71, %c2_72, %c0_73, %c0_74], %205 {strides = array<i32>} : memref<1x3x16x8xf32, #tpu.memory_space<vmem>>, vector<1x1x16x8xf32>,
    %c0_75 = arith.constant 0 : index
    %c2_76 = arith.constant 2 : index
    %c0_77 = arith.constant 0 : index
    %c0_78 = arith.constant 0 : index
    %206 = vector.load %arg8[%c0_75, %c2_76, %c0_77, %c0_78] : memref<1x3x16x16xf32, #tpu.memory_space<vmem>>, vector<1x1x16x16xf32>
    %207 = vector.shape_cast %206 : vector<1x1x16x16xf32> to vector<16x16xf32>
    %208 = vector.shape_cast %172 : vector<16x16xf32> to vector<1x1x16x16xf32>
    tpu.vector_store %arg8[%c0_75, %c2_76, %c0_77, %c0_78], %208 {strides = array<i32>} : memref<1x3x16x16xf32, #tpu.memory_space<vmem>>, vector<1x1x16x16xf32>,
    return
  }
  func.func @transform_0(%arg0: i32) -> (i32, i32, i32) {
    %c0_i32 = arith.constant 0 : i32
    %c0_i32_0 = arith.constant 0 : i32
    %c0_i32_1 = arith.constant 0 : i32
    return %arg0, %c0_i32, %c0_i32_0 : i32, i32, i32
  }
  func.func @transform_1(%arg0: i32) -> (i32, i32, i32) {
    %c0_i32 = arith.constant 0 : i32
    %c0_i32_0 = arith.constant 0 : i32
    %c0_i32_1 = arith.constant 0 : i32
    return %arg0, %c0_i32, %c0_i32_0 : i32, i32, i32
  }
  func.func @transform_2(%arg0: i32) -> (i32, i32) {
    %c0_i32 = arith.constant 0 : i32
    %c0_i32_0 = arith.constant 0 : i32
    %c0_i32_1 = arith.constant 0 : i32
    return %c0_i32, %c0_i32_0 : i32, i32
  }
  func.func @transform_3(%arg0: i32) -> (i32, i32) {
    %c0_i32 = arith.constant 0 : i32
    %c0_i32_0 = arith.constant 0 : i32
    %c0_i32_1 = arith.constant 0 : i32
    return %c0_i32, %c0_i32_0 : i32, i32
  }
  func.func @transform_4(%arg0: i32) -> (i32, i32) {
    %c0_i32 = arith.constant 0 : i32
    %c0_i32_0 = arith.constant 0 : i32
    %c0_i32_1 = arith.constant 0 : i32
    return %c0_i32, %c0_i32_0 : i32, i32
  }
  func.func @transform_5(%arg0: i32) -> (i32, i32, i32) {
    %c0_i32 = arith.constant 0 : i32
    %c0_i32_0 = arith.constant 0 : i32
    %c0_i32_1 = arith.constant 0 : i32
    %c0_i32_2 = arith.constant 0 : i32
    return %c0_i32, %c0_i32_0, %c0_i32_1 : i32, i32, i32
  }
  func.func @transform_6(%arg0: i32) -> (i32, i32, i32, i32) {
    %c0_i32 = arith.constant 0 : i32
    %c0_i32_0 = arith.constant 0 : i32
    %c0_i32_1 = arith.constant 0 : i32
    %c0_i32_2 = arith.constant 0 : i32
    return %arg0, %c0_i32, %c0_i32_0, %c0_i32_1 : i32, i32, i32, i32
  }
  func.func @transform_7(%arg0: i32) -> (i32, i32, i32, i32) {
    %c0_i32 = arith.constant 0 : i32
    %c0_i32_0 = arith.constant 0 : i32
    %c0_i32_1 = arith.constant 0 : i32
    %c0_i32_2 = arith.constant 0 : i32
    return %arg0, %c0_i32, %c0_i32_0, %c0_i32_1 : i32, i32, i32, i32
  }
}

</mosaic_0001>

<llo_original>
// kernel: graph_convolution_forward.1
$region0: #{graph_convolution_forward.1}
  #allocation0 [shape = 'u32[]', space=smem, size = 0x4, offset = 0x4, fixed_abs, tag = 'smem constant byte address 0x4 - core index']
  #allocation1 [shape = 'u32[144,128]{1,0:T(1,128)}', space=vmem, size = 0x12000, scoped, tag = 'internal scratch']
  %s0 = inlined_call_operand.vmem [shape: f32[8,16,8], index: 0, kind: input, shape index: {}]
  %s1 = inlined_call_operand.vmem [shape: f32[8,16,16], index: 1, kind: input, shape index: {}]
  %s2 = inlined_call_operand.vmem [shape: bf16[8,9], index: 2, kind: input, shape index: {}]
  %s3 = inlined_call_operand.vmem [shape: bf16[8,9], index: 3, kind: input, shape index: {}]
  %s4 = inlined_call_operand.vmem [shape: bf16[8,9], index: 4, kind: input, shape index: {}]
  %s5 = inlined_call_operand.vmem [shape: f32[3,4,8], index: 5, kind: input, shape index: {}]
  %s6 = inlined_call_operand.vmem [shape: f32[8,3,16,8], index: 6, kind: output, shape index: {0}]
  %s7 = inlined_call_operand.vmem [shape: f32[8,3,16,16], index: 7, kind: output, shape index: {1}]
  %8 = xla_tuple %s6, %s7
  %s9 = sld [smem:[#allocation0]]
  $region65: #{graph_convolution_forward.1} parent=0
    _
  %s11 = ssub.s32 1, %s9
  %s12 = scalar_select 0, %s11, %s9
  loop: start=0, step=1, limit=10
  $region2: #{graph_convolution_forward.1} parent=0 // loop_pre_header
    _
  $region3: #{graph_convolution_forward.1} parent=0 // loop_header
    %s14 = sphi 0, %s18
    %p15 = scmp.ge.s32.totalorder %s14, 10
    %s24 = sphi 0, %s26
    %s27 = sphi 0, %s24
    %s28 = sphi 0, %s27
    %s44 = sphi 0, %s28
    %s50 = sphi 0, %s52
    %s53 = sphi 0, %s50
    %s54 = sphi 0, %s53
    %s70 = sphi 0, %s54
    %s74 = sphi 0, %s74
    %s76 = sphi 0, %s74
    %s77 = sphi 0, %s76
    %s91 = sphi 0, %s77
    %s95 = sphi 0, %s95
    %s97 = sphi 0, %s95
    %s98 = sphi 0, %s97
    %s112 = sphi 0, %s98
    %s116 = sphi 0, %s116
    %s118 = sphi 0, %s116
    %s119 = sphi 0, %s118
    %s133 = sphi 0, %s119
    %s137 = sphi 0, %s137
    %s139 = sphi 0, %s137
    %s140 = sphi 0, %s139
    %s154 = sphi 0, %s140
    %s160 = sphi 0, %s162
    %s163 = sphi 0, %s160
    %s164 = sphi 0, %s163
    %s180 = sphi 0, %s164
    %s186 = sphi 0, %s188
    %s189 = sphi 0, %s186
    %s190 = sphi 0, %s189
    %s206 = sphi 0, %s190
  $region4: #{graph_convolution_forward.1} parent=0 // loop_header_branch
    %17 = sbr.rel (%p15) target = $region8
  $region5: #{graph_convolution_forward.1} parent=0 // loop_body
    %s19 = ssub.s32 %s14, 1
    %s20 = ssub.s32 %s14, 2
    %s21 = sadd.s32 %s14, 1
    %s22 = ssub.s32 %s14, %s21
    %p23 = scmp.eq.s32.totalorder %s22, 0
    %s25 = sadd.s32 %s24, 1
    %s26 = scalar_select %p23, %s24, %s25
    %p29 = pneg %p23
    %p30 = scmp.eq.s32.totalorder %s14, 7
    %p31 = por %p29, %p30
    %p32 = scmp.ne.s32.totalorder %s24, %s27
    %p33 = scmp.eq.s32.totalorder %s14, 0
    %p34 = por %p32, %p33
    %p35 = scmp.ne.s32.totalorder %s24, %s27
    %p36 = scmp.eq.s32.totalorder %s19, 7
    %p37 = por %p35, %p36
    %p38 = scmp.ne.s32.totalorder %s27, %s28
    %p39 = scmp.eq.s32.totalorder %s19, 0
    %p40 = por %p38, %p39
    %p41 = scmp.ne.s32.totalorder %s27, %s28
    %p42 = scmp.eq.s32.totalorder %s20, 7
    %p43 = por %p41, %p42
    %p45 = scmp.ne.s32.totalorder %s28, %s44
    %p46 = scmp.eq.s32.totalorder %s20, 0
    %p47 = por %p45, %p46
    %s48 = ssub.s32 %s14, %s21
    %p49 = scmp.eq.s32.totalorder %s48, 0
    %s51 = sadd.s32 %s50, 1
    %s52 = scalar_select %p49, %s50, %s51
    %p55 = pneg %p49
    %p56 = scmp.eq.s32.totalorder %s14, 7
    %p57 = por %p55, %p56
    %p58 = scmp.ne.s32.totalorder %s50, %s53
    %p59 = scmp.eq.s32.totalorder %s14, 0
    %p60 = por %p58, %p59
    %p61 = scmp.ne.s32.totalorder %s50, %s53
    %p62 = scmp.eq.s32.totalorder %s19, 7
    %p63 = por %p61, %p62
    %p64 = scmp.ne.s32.totalorder %s53, %s54
    %p65 = scmp.eq.s32.totalorder %s19, 0
    %p66 = por %p64, %p65
    %p67 = scmp.ne.s32.totalorder %s53, %s54
    %p68 = scmp.eq.s32.totalorder %s20, 7
    %p69 = por %p67, %p68
    %p71 = scmp.ne.s32.totalorder %s54, %s70
    %p72 = scmp.eq.s32.totalorder %s20, 0
    %p73 = por %p71, %p72
    %s75 = sadd.s32 %s74, 1
    %p78 = scmp.eq.s32.totalorder %s14, 7
    %p79 = scmp.ne.s32.totalorder %s74, %s76
    %p80 = scmp.eq.s32.totalorder %s14, 0
    %p81 = por %p79, %p80
    %p82 = scmp.ne.s32.totalorder %s74, %s76
    %p83 = scmp.eq.s32.totalorder %s19, 7
    %p84 = por %p82, %p83
    %p85 = scmp.ne.s32.totalorder %s76, %s77
    %p86 = scmp.eq.s32.totalorder %s19, 0
    %p87 = por %p85, %p86
    %p88 = scmp.ne.s32.totalorder %s76, %s77
    %p89 = scmp.eq.s32.totalorder %s20, 7
    %p90 = por %p88, %p89
    %p92 = scmp.ne.s32.totalorder %s77, %s91
    %p93 = scmp.eq.s32.totalorder %s20, 0
    %p94 = por %p92, %p93
    %s96 = sadd.s32 %s95, 1
    %p99 = scmp.eq.s32.totalorder %s14, 7
    %p100 = scmp.ne.s32.totalorder %s95, %s97
    %p101 = scmp.eq.s32.totalorder %s14, 0
    %p102 = por %p100, %p101
    %p103 = scmp.ne.s32.totalorder %s95, %s97
    %p104 = scmp.eq.s32.totalorder %s19, 7
    %p105 = por %p103, %p104
    %p106 = scmp.ne.s32.totalorder %s97, %s98
    %p107 = scmp.eq.s32.totalorder %s19, 0
    %p108 = por %p106, %p107
    %p109 = scmp.ne.s32.totalorder %s97, %s98
    %p110 = scmp.eq.s32.totalorder %s20, 7
    %p111 = por %p109, %p110
    %p113 = scmp.ne.s32.totalorder %s98, %s112
    %p114 = scmp.eq.s32.totalorder %s20, 0
    %p115 = por %p113, %p114
    %s117 = sadd.s32 %s116, 1
    %p120 = scmp.eq.s32.totalorder %s14, 7
    %p121 = scmp.ne.s32.totalorder %s116, %s118
    %p122 = scmp.eq.s32.totalorder %s14, 0
    %p123 = por %p121, %p122
    %p124 = scmp.ne.s32.totalorder %s116, %s118
    %p125 = scmp.eq.s32.totalorder %s19, 7
    %p126 = por %p124, %p125
    %p127 = scmp.ne.s32.totalorder %s118, %s119
    %p128 = scmp.eq.s32.totalorder %s19, 0
    %p129 = por %p127, %p128
    %p130 = scmp.ne.s32.totalorder %s118, %s119
    %p131 = scmp.eq.s32.totalorder %s20, 7
    %p132 = por %p130, %p131
    %p134 = scmp.ne.s32.totalorder %s119, %s133
    %p135 = scmp.eq.s32.totalorder %s20, 0
    %p136 = por %p134, %p135
    %s138 = sadd.s32 %s137, 1
    %p141 = scmp.eq.s32.totalorder %s14, 7
    %p142 = scmp.ne.s32.totalorder %s137, %s139
    %p143 = scmp.eq.s32.totalorder %s14, 0
    %p144 = por %p142, %p143
    %p145 = scmp.ne.s32.totalorder %s137, %s139
    %p146 = scmp.eq.s32.totalorder %s19, 7
    %p147 = por %p145, %p146
    %p148 = scmp.ne.s32.totalorder %s139, %s140
    %p149 = scmp.eq.s32.totalorder %s19, 0
    %p150 = por %p148, %p149
    %p151 = scmp.ne.s32.totalorder %s139, %s140
    %p152 = scmp.eq.s32.totalorder %s20, 7
    %p153 = por %p151, %p152
    %p155 = scmp.ne.s32.totalorder %s140, %s154
    %p156 = scmp.eq.s32.totalorder %s20, 0
    %p157 = por %p155, %p156
    %s158 = ssub.s32 %s14, %s21
    %p159 = scmp.eq.s32.totalorder %s158, 0
    %s161 = sadd.s32 %s160, 1
    %s162 = scalar_select %p159, %s160, %s161
    %p165 = pneg %p159
    %p166 = scmp.eq.s32.totalorder %s14, 7
    %p167 = por %p165, %p166
    %p168 = scmp.ne.s32.totalorder %s160, %s163
    %p169 = scmp.eq.s32.totalorder %s14, 0
    %p170 = por %p168, %p169
    %p171 = scmp.ne.s32.totalorder %s160, %s163
    %p172 = scmp.eq.s32.totalorder %s19, 7
    %p173 = por %p171, %p172
    %p174 = scmp.ne.s32.totalorder %s163, %s164
    %p175 = scmp.eq.s32.totalorder %s19, 0
    %p176 = por %p174, %p175
    %p177 = scmp.ne.s32.totalorder %s163, %s164
    %p178 = scmp.eq.s32.totalorder %s20, 7
    %p179 = por %p177, %p178
    %p181 = scmp.ne.s32.totalorder %s164, %s180
    %p182 = scmp.eq.s32.totalorder %s20, 0
    %p183 = por %p181, %p182
    %s184 = ssub.s32 %s14, %s21
    %p185 = scmp.eq.s32.totalorder %s184, 0
    %s187 = sadd.s32 %s186, 1
    %s188 = scalar_select %p185, %s186, %s187
    %p191 = pneg %p185
    %p192 = scmp.eq.s32.totalorder %s14, 7
    %p193 = por %p191, %p192
    %p194 = scmp.ne.s32.totalorder %s186, %s189
    %p195 = scmp.eq.s32.totalorder %s14, 0
    %p196 = por %p194, %p195
    %p197 = scmp.ne.s32.totalorder %s186, %s189
    %p198 = scmp.eq.s32.totalorder %s19, 7
    %p199 = por %p197, %p198
    %p200 = scmp.ne.s32.totalorder %s189, %s190
    %p201 = scmp.eq.s32.totalorder %s19, 0
    %p202 = por %p200, %p201
    %p203 = scmp.ne.s32.totalorder %s189, %s190
    %p204 = scmp.eq.s32.totalorder %s20, 7
    %p205 = por %p203, %p204
    %p207 = scmp.ne.s32.totalorder %s190, %s206
    %p208 = scmp.eq.s32.totalorder %s20, 0
    %p209 = por %p207, %p208
    %p210 = scmp.le.s32.totalorder 1, %s14
    %p211 = scmp.lt.s32.totalorder %s14, 9
    %p212 = pnand %p210, %p211
    %p213 = pneg %p212
    // Predicated region
    $region9: #{graph_convolution_forward.1} parent=5 // pred_check
      _
    $region10: #{graph_convolution_forward.1} parent=5 // pred_check_branch
      %215 = sbr.rel (%p212) target = $region12
    $region11: #{graph_convolution_forward.1} parent=5 // pred_region
      %s216 = ssub.s32 %s14, 1
      // Predicated region
      $region13: #{graph_convolution_forward.1} parent=11 // pred_check
        %p217 = pneg %p87
      $region14: #{graph_convolution_forward.1} parent=11 // pred_check_branch
        %219 = sbr.rel (%p217) target = $region16
      $region15: #{graph_convolution_forward.1} parent=11 // pred_region
        _
      $region16: #{graph_convolution_forward.1} parent=11 // pred_fallthru
        _
      // Predicated region
      $region17: #{graph_convolution_forward.1} parent=11 // pred_check
        %p220 = pneg %p108
      $region18: #{graph_convolution_forward.1} parent=11 // pred_check_branch
        %222 = sbr.rel (%p220) target = $region20
      $region19: #{graph_convolution_forward.1} parent=11 // pred_region
        _
      $region20: #{graph_convolution_forward.1} parent=11 // pred_fallthru
        _
      // Predicated region
      $region21: #{graph_convolution_forward.1} parent=11 // pred_check
        %p223 = pneg %p129
      $region22: #{graph_convolution_forward.1} parent=11 // pred_check_branch
        %225 = sbr.rel (%p223) target = $region24
      $region23: #{graph_convolution_forward.1} parent=11 // pred_region
        _
      $region24: #{graph_convolution_forward.1} parent=11 // pred_fallthru
        _
      // Predicated region
      $region25: #{graph_convolution_forward.1} parent=11 // pred_check
        %p226 = pneg %p150
      $region26: #{graph_convolution_forward.1} parent=11 // pred_check_branch
        %228 = sbr.rel (%p226) target = $region28
      $region27: #{graph_convolution_forward.1} parent=11 // pred_region
        _
      $region28: #{graph_convolution_forward.1} parent=11 // pred_fallthru
        _
    $region12: #{graph_convolution_forward.1} parent=5 // pred_fallthru
      _
    %p229 = scmp.lt.s32.totalorder %s14, 8
    // Predicated region
    $region29: #{graph_convolution_forward.1} parent=5 // pred_check
      %p230 = pneg %p229
    $region30: #{graph_convolution_forward.1} parent=5 // pred_check_branch
      %232 = sbr.rel (%p230) target = $region32
    $region31: #{graph_convolution_forward.1} parent=5 // pred_region
      // Predicated region
      $region33: #{graph_convolution_forward.1} parent=31 // pred_check
        %p233 = pneg %p34
      $region34: #{graph_convolution_forward.1} parent=31 // pred_check_branch
        %235 = sbr.rel (%p233) target = $region36
      $region35: #{graph_convolution_forward.1} parent=31 // pred_region
        %p236 = scmp.lt.s32.totalorder %s14, 7
        %s237 = scalar_select %p236, %s14, 7
        %s238 = smul.addr %s237, 2
        %s239 = smul.addr %s238, 8
        %s240 = scalar_lea.vmem %s0, %s239
      $region36: #{graph_convolution_forward.1} parent=31 // pred_fallthru
        _
      // Predicated region
      $region37: #{graph_convolution_forward.1} parent=31 // pred_check
        %p241 = pneg %p60
      $region38: #{graph_convolution_forward.1} parent=31 // pred_check_branch
        %243 = sbr.rel (%p241) target = $region40
      $region39: #{graph_convolution_forward.1} parent=31 // pred_region
        %p244 = scmp.lt.s32.totalorder %s14, 7
        %s245 = scalar_select %p244, %s14, 7
        %s246 = smul.addr %s245, 2
        %s247 = smul.addr %s246, 8
        %s248 = scalar_lea.vmem %s1, %s247
      $region40: #{graph_convolution_forward.1} parent=31 // pred_fallthru
        _
    $region32: #{graph_convolution_forward.1} parent=5 // pred_fallthru
      _
    %p249 = scmp.le.s32.totalorder 1, %s14
    %p250 = scmp.lt.s32.totalorder %s14, 9
    %p251 = pnand %p249, %p250
    %p252 = pneg %p251
    // Predicated region
    $region41: #{graph_convolution_forward.1} parent=5 // pred_check
      _
    $region42: #{graph_convolution_forward.1} parent=5 // pred_check_branch
      %254 = sbr.rel (%p251) target = $region44
    $region43: #{graph_convolution_forward.1} parent=5 // pred_region
      %s255 = ssub.s32 %s14, 1
      %p256 = scmp.lt.s32.totalorder %s19, 7
      %s257 = scalar_select %p256, %s19, 7
      %s258 = smul.addr %s257, 2
      %s259 = smul.addr %s258, 8
      %s260 = scalar_lea.vmem %s0, %s259
      %p261 = pneg %p40
      %p262 = pneg %p37
      %p263 = scmp.lt.s32.totalorder %s19, 7
      %s264 = scalar_select %p263, %s19, 7
      %s265 = smul.addr %s264, 2
      %s266 = smul.addr %s265, 8
      %s267 = scalar_lea.vmem %s1, %s266
      %p268 = pneg %p66
      %p269 = pneg %p63
      %p270 = pneg %p87
      %p271 = pneg %p84
      %p272 = pneg %p108
      %p273 = pneg %p105
      %p274 = pneg %p129
      %p275 = pneg %p126
      %p276 = pneg %p150
      %p277 = pneg %p147
      %p278 = pneg %p176
      %p279 = pneg %p173
      %p280 = scmp.lt.s32.totalorder %s19, 7
      %s281 = scalar_select %p280, %s19, 7
      %s282 = smul.addr %s281, 6
      %s283 = smul.addr %s282, 8
      %s284 = scalar_lea.vmem %s6, %s283
      %p285 = pneg %p202
      %p286 = pneg %p199
      %p287 = scmp.lt.s32.totalorder %s19, 7
      %s288 = scalar_select %p287, %s19, 7
      %s289 = smul.addr %s288, 6
      %s290 = smul.addr %s289, 8
      %s291 = scalar_lea.vmem %s7, %s290
      %p292 = scmp.lt.s32.totalorder %s19, 7
      %s293 = scalar_select %p292, %s19, 7
      %s294 = smul.addr %s293, 2
      %s295 = smul.addr %s294, 8
      %s296 = scalar_lea.vmem %s0, %s295
      %p297 = scmp.lt.s32.totalorder %s19, 7
      %s298 = scalar_select %p297, %s19, 7
      %s299 = smul.addr %s298, 2
      %s300 = smul.addr %s299, 8
      %s301 = scalar_lea.vmem %s1, %s300
      %p302 = scmp.lt.s32.totalorder %s19, 7
      %s303 = scalar_select %p302, %s19, 7
      %s304 = smul.addr %s303, 6
      %s305 = smul.addr %s304, 8
      %s306 = scalar_lea.vmem %s6, %s305
      %p307 = scmp.lt.s32.totalorder %s19, 7
      %s308 = scalar_select %p307, %s19, 7
      %s309 = smul.addr %s308, 6
      %s310 = smul.addr %s309, 8
      %s311 = scalar_lea.vmem %s7, %s310
      %v313 = vld [vmem:[%s301] sm:$0xff]
      %v314 = vld [vmem:[%s301 + $0x8] sm:$0xff]
      %v315 = vsub.f32 %v313, 1.0
      %v316 = vsub.f32 %v314, 1.0
      %v317 = vmul.f32 %v315, 1e+30
      %v318 = vmul.f32 %v316, 1e+30
      %v319 = vld [vmem:[%s296] sm:$0xff]
      %v320 = vld [vmem:[%s296 + $0x8] sm:$0xff]
      %v321 = vld [vmem:[%s5] sm:$0xf]
      %v322 = vpack.c.bf16 %v320, %v319
      %v323 = vld [vmem:[%s2] sm:$0xf]
      %vm324 = vcmask 64512
      %v326 = vsel %vm324, %v322, 0
      %vm328 = vcmask 1043456
      %v330 = vsel %vm328, %v323, 0
      %332 = vmatprep.subr.bf16.mxu0 0
      %333 = vmatpush1.bf16.msra.mxu0 %v330
      %334 = vmatprep.subr.bf16.mxu0 0
      %335 = vmatpush1.bf16.msra.mxu0 0
      %336 = vmatprep.subr.bf16.mxu0 0
      %337 = vmatpush1.bf16.msra.mxu0 0
      %338 = vmatprep.subr.bf16.mxu0 0
      %339 = vmatpush1.bf16.msra.mxu0 0
      %340 = vmatprep.subr.bf16.mxu0 0
      %341 = vmatpush1.bf16.msra.mxu0 0
      %342 = vmatprep.subr.bf16.mxu0 0
      %343 = vmatpush1.bf16.msra.mxu0 0
      %344 = vmatprep.subr.bf16.mxu0 0
      %345 = vmatpush1.bf16.msra.mxu0 0
      %346 = vmatprep.subr.bf16.mxu0 0
      %347 = vmatpush1.bf16.msra.mxu0 0
      %348 = vmatprep.subr.bf16.mxu0 0
      %349 = vmatpush1.bf16.msra.mxu0 0
      %350 = vmatprep.subr.bf16.mxu0 0
      %351 = vmatpush1.bf16.msra.mxu0 0
      %352 = vmatprep.subr.bf16.mxu0 0
      %353 = vmatpush1.bf16.msra.mxu0 0
      %354 = vmatprep.subr.bf16.mxu0 0
      %355 = vmatpush1.bf16.msra.mxu0 0
      %356 = vmatprep.subr.bf16.mxu0 0
      %357 = vmatpush1.bf16.msra.mxu0 0
      %358 = vmatprep.subr.bf16.mxu0 0
      %359 = vmatpush1.bf16.msra.mxu0 0
      %360 = vmatprep.subr.bf16.mxu0 0
      %361 = vmatpush1.bf16.msra.mxu0 0
      %362 = vmatprep.subr.bf16.mxu0 0
      %363 = vmatpush1.bf16.msra.mxu0 0
      %364 = vmatprep.mubr.bf16.mxu0 0
      %365 = vmatmul.mubr.bf16.gmra.mrb[0].mxu0 %v326
      %v366 = vpop.f32.mrb[0].mxu0
      %v367 = vadd.f32 0.0, %v366
      %v368 = vpop.f32.mrb[0].mxu0
      %v369 = vpop.f32.mrb[0].mxu0
      %v370 = vadd.f32 0.0, %v369
      %v371 = vpop.f32.mrb[0].mxu0
      %372 = vdwg.mxu0
      %v373 = vpack.c.bf16 %v321, %v321
      %v374 = vpack.c.bf16 %v370, %v367
      %v376 = vsel %vm324, %v373, 0
      %v379 = vsel %vm324, %v374, 0
      %381 = vmatprep.subr.bf16.mxu0 0
      %382 = vmatpush1.bf16.xpose.msra.mxu0 %v379
      %383 = vmatprep.subr.bf16.mxu0 0
      %384 = vmatpush1.bf16.xpose.msra.mxu0 0
      %385 = vmatprep.subr.bf16.mxu0 0
      %386 = vmatpush1.bf16.xpose.msra.mxu0 0
      %387 = vmatprep.subr.bf16.mxu0 0
      %388 = vmatpush1.bf16.xpose.msra.mxu0 0
      %389 = vmatprep.subr.bf16.mxu0 0
      %390 = vmatpush1.bf16.xpose.msra.mxu0 0
      %391 = vmatprep.subr.bf16.mxu0 0
      %392 = vmatpush1.bf16.xpose.msra.mxu0 0
      %393 = vmatprep.subr.bf16.mxu0 0
      %394 = vmatpush1.bf16.xpose.msra.mxu0 0
      %395 = vmatprep.subr.bf16.mxu0 0
      %396 = vmatpush1.bf16.xpose.msra.mxu0 0
      %397 = vmatprep.subr.bf16.mxu0 0
      %398 = vmatpush1.bf16.xpose.msra.mxu0 0
      %399 = vmatprep.subr.bf16.mxu0 0
      %400 = vmatpush1.bf16.xpose.msra.mxu0 0
      %401 = vmatprep.subr.bf16.mxu0 0
      %402 = vmatpush1.bf16.xpose.msra.mxu0 0
      %403 = vmatprep.subr.bf16.mxu0 0
      %404 = vmatpush1.bf16.xpose.msra.mxu0 0
      %405 = vmatprep.subr.bf16.mxu0 0
      %406 = vmatpush1.bf16.xpose.msra.mxu0 0
      %407 = vmatprep.subr.bf16.mxu0 0
      %408 = vmatpush1.bf16.xpose.msra.mxu0 0
      %409 = vmatprep.subr.bf16.mxu0 0
      %410 = vmatpush1.bf16.xpose.msra.mxu0 0
      %411 = vmatprep.subr.bf16.mxu0 0
      %412 = vmatpush1.bf16.xpose.msra.mxu0 0
      %413 = vmatprep.mubr.bf16.mxu0 0
      %414 = vmatmul.mubr.bf16.gmra.mrb[0].mxu0 %v376
      %v415 = vpop.f32.mrb[0].mxu0
      %v416 = vadd.f32 0.0, %v415
      %v417 = vpop.f32.mrb[0].mxu0
      %v418 = vpop.f32.mrb[0].mxu0
      %v419 = vpop.f32.mrb[0].mxu0
      %420 = vdwg.mxu0
      %422 = vset.pattern.permute.xlu0 8
      %423 = vperm.xlu0 %422, %v367
      %v424 = vpop.permute.xlu0 %423
      %427 = vset.pattern.permute.xlu0 8
      %428 = vperm.xlu0 %427, %v370
      %v429 = vpop.permute.xlu0 %428
      %v431 = vlaneseq
      %v432 = vshrl.u32 %v431, 7
      %v433 = vsub.s32 0, %v432
      %v434 = vrot.slane %v416, %v433
      %v435 = vadd.f32 %v424, %v434
      %v436 = vadd.f32 %v429, %v434
      %v437 = vmul.f32 %v435, 0.2
      %v438 = vmul.f32 %v436, 0.2
      %v439 = vmax.f32 %v435, %v437
      %v440 = vmax.f32 %v436, %v438
      %v441 = vadd.f32 %v439, %v317
      %v442 = vadd.f32 %v440, %v318
      %vm443 = vcmask 130048
      %v444 = vsel %vm443, %v441, -inf
      %445 = vmax.xlane.f32.xlu0 %v444
      %v446 = vpop.xlane.xlu0 %445
      %v447 = vsel %vm443, %v442, -inf
      %448 = vmax.xlane.f32.xlu0 %v447
      %v449 = vpop.xlane.xlu0 %448
      %v450 = vsub.f32 %v441, %v446
      %v451 = vsub.f32 %v442, %v449
      %v452 = vmul.f32 %v450, 1.442695
      %v453 = vpow.pop %v452
      %v454 = vmul.f32 %v451, 1.442695
      %v455 = vpow.pop %v454
      %v456 = vsel %vm443, %v453, 0.0
      %457 = vadd.xlane.f32.xlu0 %v456
      %v458 = vpop.xlane.xlu0 %457
      %v459 = vsel %vm443, %v455, 0.0
      %460 = vadd.xlane.f32.xlu0 %v459
      %v461 = vpop.xlane.xlu0 %460
      %v462 = vrcp.pop %v458
      %v463 = vrcp.pop %v461
      %v464 = vmul.f32 %v453, %v462
      %v465 = vmul.f32 %v455, %v463
      %v466 = vpack.c.bf16 %v465, %v464
      %v467 = vlaneseq
      %v468 = vshrl.u32 %v467, 7
      %v469 = vsub.s32 1, %v468
      %v470 = vrot.slane %v321, %v469
      %v472 = vsel %vm443, %v466, 0
      %474 = vmatprep.subr.bf16.mxu0 0
      %475 = vmatpush1.bf16.msra.mxu0 %v374
      %476 = vmatprep.subr.bf16.mxu0 0
      %477 = vmatpush1.bf16.msra.mxu0 0
      %478 = vmatprep.subr.bf16.mxu0 0
      %479 = vmatpush1.bf16.msra.mxu0 0
      %480 = vmatprep.subr.bf16.mxu0 0
      %481 = vmatpush1.bf16.msra.mxu0 0
      %482 = vmatprep.subr.bf16.mxu0 0
      %483 = vmatpush1.bf16.msra.mxu0 0
      %484 = vmatprep.subr.bf16.mxu0 0
      %485 = vmatpush1.bf16.msra.mxu0 0
      %486 = vmatprep.subr.bf16.mxu0 0
      %487 = vmatpush1.bf16.msra.mxu0 0
      %488 = vmatprep.subr.bf16.mxu0 0
      %489 = vmatpush1.bf16.msra.mxu0 0
      %490 = vmatprep.subr.bf16.mxu0 0
      %491 = vmatpush1.bf16.msra.mxu0 0
      %492 = vmatprep.subr.bf16.mxu0 0
      %493 = vmatpush1.bf16.msra.mxu0 0
      %494 = vmatprep.subr.bf16.mxu0 0
      %495 = vmatpush1.bf16.msra.mxu0 0
      %496 = vmatprep.subr.bf16.mxu0 0
      %497 = vmatpush1.bf16.msra.mxu0 0
      %498 = vmatprep.subr.bf16.mxu0 0
      %499 = vmatpush1.bf16.msra.mxu0 0
      %500 = vmatprep.subr.bf16.mxu0 0
      %501 = vmatpush1.bf16.msra.mxu0 0
      %502 = vmatprep.subr.bf16.mxu0 0
      %503 = vmatpush1.bf16.msra.mxu0 0
      %504 = vmatprep.subr.bf16.mxu0 0
      %505 = vmatpush1.bf16.msra.mxu0 0
      %506 = vmatprep.mubr.bf16.mxu0 0
      %507 = vmatmul.mubr.bf16.gmra.mrb[0].mxu0 %v472
      %v508 = vpop.f32.mrb[0].mxu0
      %v509 = vadd.f32 %v470, %v508
      %v510 = vpop.f32.mrb[0].mxu0
      %v511 = vpop.f32.mrb[0].mxu0
      %v512 = vadd.f32 %v470, %v511
      %v513 = vpop.f32.mrb[0].mxu0
      %514 = vdwg.mxu0
      %v515 = vmax.f32 %v509, 0.0
      %v516 = vmax.f32 %v512, 0.0
      %v517 = vsel %vm324, %v515, 0.0
      %v518 = vsel %vm324, %v516, 0.0
      %v519 = vadd.f32 %v517, %v518
      %v520 = vrot.slane %v519, 4
      %v521 = vadd.f32 %v519, %v520
      %v522 = vrot.slane %v521, 2
      %v523 = vadd.f32 %v521, %v522
      %v524 = vrot.slane %v523, 1
      %v525 = vadd.f32 %v523, %v524
      %v526 = vrcp.pop 16.0
      %v527 = vmul.f32 %v525, %v526
      %v528 = vsub.f32 %v515, %v527
      %v529 = vsub.f32 %v516, %v527
      %v530 = vmul.f32 %v528, %v528
      %v531 = vmul.f32 %v529, %v529
      %v532 = vsel %vm324, %v530, 0.0
      %v533 = vsel %vm324, %v531, 0.0
      %v534 = vadd.f32 %v532, %v533
      %v535 = vrot.slane %v534, 4
      %v536 = vadd.f32 %v534, %v535
      %v537 = vrot.slane %v536, 2
      %v538 = vadd.f32 %v536, %v537
      %v539 = vrot.slane %v538, 1
      %v540 = vadd.f32 %v538, %v539
      %v541 = vmul.f32 %v540, %v526
      %v542 = vadd.f32 %v541, 1e-05
      %v543 = vrsqrt.pop %v542
      %v544 = vmul.f32 %v321, %v543
      %v545 = vmul.f32 %v527, %v544
      %v547 = vrot.slane %v545, 7
      %v549 = vsub.f32 %v321, %v547
      %v550 = vlaneseq
      %v551 = vshrl.u32 %v550, 7
      %v552 = vsub.s32 2, %v551
      %v553 = vrot.slane %v544, %v552
      %v554 = vmul.f32 %v515, %v553
      %v555 = vmul.f32 %v516, %v553
      %v556 = vlaneseq
      %v557 = vshrl.u32 %v556, 7
      %v558 = vsub.s32 3, %v557
      %v559 = vrot.slane %v549, %v558
      %v560 = vadd.f32 %v554, %v559
      %v561 = vadd.f32 %v555, %v559
      %562 = vst.msk [vmem:[%s306] sm:$0xff] %vm324, %v560
      %563 = vst.msk [vmem:[%s306 + $0x8] sm:$0xff] %vm324, %v561
      %564 = vst.msk [vmem:[%s311] sm:$0xff] %vm443, %v464
      %565 = vst.msk [vmem:[%s311 + $0x8] sm:$0xff] %vm443, %v465
      %s566 = scalar_lea.vmem %s5, 4
      %v567 = vld [vmem:[%s566] sm:$0xf]
      %v568 = vpack.c.bf16 %v561, %v560
      %v569 = vld [vmem:[%s3] sm:$0xf]
      %v571 = vsel %vm324, %v568, 0
      %v574 = vsel %vm328, %v569, 0
      %576 = vmatprep.subr.bf16.mxu0 0
      %577 = vmatpush1.bf16.msra.mxu0 %v574
      %578 = vmatprep.subr.bf16.mxu0 0
      %579 = vmatpush1.bf16.msra.mxu0 0
      %580 = vmatprep.subr.bf16.mxu0 0
      %581 = vmatpush1.bf16.msra.mxu0 0
      %582 = vmatprep.subr.bf16.mxu0 0
      %583 = vmatpush1.bf16.msra.mxu0 0
      %584 = vmatprep.subr.bf16.mxu0 0
      %585 = vmatpush1.bf16.msra.mxu0 0
      %586 = vmatprep.subr.bf16.mxu0 0
      %587 = vmatpush1.bf16.msra.mxu0 0
      %588 = vmatprep.subr.bf16.mxu0 0
      %589 = vmatpush1.bf16.msra.mxu0 0
      %590 = vmatprep.subr.bf16.mxu0 0
      %591 = vmatpush1.bf16.msra.mxu0 0
      %592 = vmatprep.subr.bf16.mxu0 0
      %593 = vmatpush1.bf16.msra.mxu0 0
      %594 = vmatprep.subr.bf16.mxu0 0
      %595 = vmatpush1.bf16.msra.mxu0 0
      %596 = vmatprep.subr.bf16.mxu0 0
      %597 = vmatpush1.bf16.msra.mxu0 0
      %598 = vmatprep.subr.bf16.mxu0 0
      %599 = vmatpush1.bf16.msra.mxu0 0
      %600 = vmatprep.subr.bf16.mxu0 0
      %601 = vmatpush1.bf16.msra.mxu0 0
      %602 = vmatprep.subr.bf16.mxu0 0
      %603 = vmatpush1.bf16.msra.mxu0 0
      %604 = vmatprep.subr.bf16.mxu0 0
      %605 = vmatpush1.bf16.msra.mxu0 0
      %606 = vmatprep.subr.bf16.mxu0 0
      %607 = vmatpush1.bf16.msra.mxu0 0
      %608 = vmatprep.mubr.bf16.mxu0 0
      %609 = vmatmul.mubr.bf16.gmra.mrb[0].mxu0 %v571
      %v610 = vpop.f32.mrb[0].mxu0
      %v611 = vadd.f32 0.0, %v610
      %v612 = vpop.f32.mrb[0].mxu0
      %v613 = vpop.f32.mrb[0].mxu0
      %v614 = vadd.f32 0.0, %v613
      %v615 = vpop.f32.mrb[0].mxu0
      %616 = vdwg.mxu0
      %v617 = vpack.c.bf16 %v567, %v567
      %v618 = vpack.c.bf16 %v614, %v611
      %v620 = vsel %vm324, %v617, 0
      %v623 = vsel %vm324, %v618, 0
      %625 = vmatprep.subr.bf16.mxu0 0
      %626 = vmatpush1.bf16.xpose.msra.mxu0 %v623
      %627 = vmatprep.subr.bf16.mxu0 0
      %628 = vmatpush1.bf16.xpose.msra.mxu0 0
      %629 = vmatprep.subr.bf16.mxu0 0
      %630 = vmatpush1.bf16.xpose.msra.mxu0 0
      %631 = vmatprep.subr.bf16.mxu0 0
      %632 = vmatpush1.bf16.xpose.msra.mxu0 0
      %633 = vmatprep.subr.bf16.mxu0 0
      %634 = vmatpush1.bf16.xpose.msra.mxu0 0
      %635 = vmatprep.subr.bf16.mxu0 0
      %636 = vmatpush1.bf16.xpose.msra.mxu0 0
      %637 = vmatprep.subr.bf16.mxu0 0
      %638 = vmatpush1.bf16.xpose.msra.mxu0 0
      %639 = vmatprep.subr.bf16.mxu0 0
      %640 = vmatpush1.bf16.xpose.msra.mxu0 0
      %641 = vmatprep.subr.bf16.mxu0 0
      %642 = vmatpush1.bf16.xpose.msra.mxu0 0
      %643 = vmatprep.subr.bf16.mxu0 0
      %644 = vmatpush1.bf16.xpose.msra.mxu0 0
      %645 = vmatprep.subr.bf16.mxu0 0
      %646 = vmatpush1.bf16.xpose.msra.mxu0 0
      %647 = vmatprep.subr.bf16.mxu0 0
      %648 = vmatpush1.bf16.xpose.msra.mxu0 0
      %649 = vmatprep.subr.bf16.mxu0 0
      %650 = vmatpush1.bf16.xpose.msra.mxu0 0
      %651 = vmatprep.subr.bf16.mxu0 0
      %652 = vmatpush1.bf16.xpose.msra.mxu0 0
      %653 = vmatprep.subr.bf16.mxu0 0
      %654 = vmatpush1.bf16.xpose.msra.mxu0 0
      %655 = vmatprep.subr.bf16.mxu0 0
      %656 = vmatpush1.bf16.xpose.msra.mxu0 0
      %657 = vmatprep.mubr.bf16.mxu0 0
      %658 = vmatmul.mubr.bf16.gmra.mrb[0].mxu0 %v620
      %v659 = vpop.f32.mrb[0].mxu0
      %v660 = vadd.f32 0.0, %v659
      %v661 = vpop.f32.mrb[0].mxu0
      %v662 = vpop.f32.mrb[0].mxu0
      %v663 = vpop.f32.mrb[0].mxu0
      %664 = vdwg.mxu0
      %666 = vset.pattern.permute.xlu0 8
      %667 = vperm.xlu0 %666, %v611
      %v668 = vpop.permute.xlu0 %667
      %671 = vset.pattern.permute.xlu0 8
      %672 = vperm.xlu0 %671, %v614
      %v673 = vpop.permute.xlu0 %672
      %v675 = vlaneseq
      %v676 = vshrl.u32 %v675, 7
      %v677 = vsub.s32 0, %v676
      %v678 = vrot.slane %v660, %v677
      %v679 = vadd.f32 %v668, %v678
      %v680 = vadd.f32 %v673, %v678
      %v681 = vmul.f32 %v679, 0.2
      %v682 = vmul.f32 %v680, 0.2
      %v683 = vmax.f32 %v679, %v681
      %v684 = vmax.f32 %v680, %v682
      %v685 = vadd.f32 %v683, %v317
      %v686 = vadd.f32 %v684, %v318
      %v687 = vsel %vm443, %v685, -inf
      %688 = vmax.xlane.f32.xlu0 %v687
      %v689 = vpop.xlane.xlu0 %688
      %v690 = vsel %vm443, %v686, -inf
      %691 = vmax.xlane.f32.xlu0 %v690
      %v692 = vpop.xlane.xlu0 %691
      %v693 = vsub.f32 %v685, %v689
      %v694 = vsub.f32 %v686, %v692
      %v695 = vmul.f32 %v693, 1.442695
      %v696 = vpow.pop %v695
      %v697 = vmul.f32 %v694, 1.442695
      %v698 = vpow.pop %v697
      %v699 = vsel %vm443, %v696, 0.0
      %700 = vadd.xlane.f32.xlu0 %v699
      %v701 = vpop.xlane.xlu0 %700
      %v702 = vsel %vm443, %v698, 0.0
      %703 = vadd.xlane.f32.xlu0 %v702
      %v704 = vpop.xlane.xlu0 %703
      %v705 = vrcp.pop %v701
      %v706 = vrcp.pop %v704
      %v707 = vmul.f32 %v696, %v705
      %v708 = vmul.f32 %v698, %v706
      %v709 = vpack.c.bf16 %v708, %v707
      %v710 = vlaneseq
      %v711 = vshrl.u32 %v710, 7
      %v712 = vsub.s32 1, %v711
      %v713 = vrot.slane %v567, %v712
      %v715 = vsel %vm443, %v709, 0
      %717 = vmatprep.subr.bf16.mxu0 0
      %718 = vmatpush1.bf16.msra.mxu0 %v618
      %719 = vmatprep.subr.bf16.mxu0 0
      %720 = vmatpush1.bf16.msra.mxu0 0
      %721 = vmatprep.subr.bf16.mxu0 0
      %722 = vmatpush1.bf16.msra.mxu0 0
      %723 = vmatprep.subr.bf16.mxu0 0
      %724 = vmatpush1.bf16.msra.mxu0 0
      %725 = vmatprep.subr.bf16.mxu0 0
      %726 = vmatpush1.bf16.msra.mxu0 0
      %727 = vmatprep.subr.bf16.mxu0 0
      %728 = vmatpush1.bf16.msra.mxu0 0
      %729 = vmatprep.subr.bf16.mxu0 0
      %730 = vmatpush1.bf16.msra.mxu0 0
      %731 = vmatprep.subr.bf16.mxu0 0
      %732 = vmatpush1.bf16.msra.mxu0 0
      %733 = vmatprep.subr.bf16.mxu0 0
      %734 = vmatpush1.bf16.msra.mxu0 0
      %735 = vmatprep.subr.bf16.mxu0 0
      %736 = vmatpush1.bf16.msra.mxu0 0
      %737 = vmatprep.subr.bf16.mxu0 0
      %738 = vmatpush1.bf16.msra.mxu0 0
      %739 = vmatprep.subr.bf16.mxu0 0
      %740 = vmatpush1.bf16.msra.mxu0 0
      %741 = vmatprep.subr.bf16.mxu0 0
      %742 = vmatpush1.bf16.msra.mxu0 0
      %743 = vmatprep.subr.bf16.mxu0 0
      %744 = vmatpush1.bf16.msra.mxu0 0
      %745 = vmatprep.subr.bf16.mxu0 0
      %746 = vmatpush1.bf16.msra.mxu0 0
      %747 = vmatprep.subr.bf16.mxu0 0
      %748 = vmatpush1.bf16.msra.mxu0 0
      %749 = vmatprep.mubr.bf16.mxu0 0
      %750 = vmatmul.mubr.bf16.gmra.mrb[0].mxu0 %v715
      %v751 = vpop.f32.mrb[0].mxu0
      %v752 = vadd.f32 %v713, %v751
      %v753 = vpop.f32.mrb[0].mxu0
      %v754 = vpop.f32.mrb[0].mxu0
      %v755 = vadd.f32 %v713, %v754
      %v756 = vpop.f32.mrb[0].mxu0
      %757 = vdwg.mxu0
      %v758 = vmax.f32 %v752, 0.0
      %v759 = vmax.f32 %v755, 0.0
      %v760 = vsel %vm324, %v758, 0.0
      %v761 = vsel %vm324, %v759, 0.0
      %v762 = vadd.f32 %v760, %v761
      %v763 = vrot.slane %v762, 4
      %v764 = vadd.f32 %v762, %v763
      %v765 = vrot.slane %v764, 2
      %v766 = vadd.f32 %v764, %v765
      %v767 = vrot.slane %v766, 1
      %v768 = vadd.f32 %v766, %v767
      %v769 = vmul.f32 %v768, %v526
      %v770 = vsub.f32 %v758, %v769
      %v771 = vsub.f32 %v759, %v769
      %v772 = vmul.f32 %v770, %v770
      %v773 = vmul.f32 %v771, %v771
      %v774 = vsel %vm324, %v772, 0.0
      %v775 = vsel %vm324, %v773, 0.0
      %v776 = vadd.f32 %v774, %v775
      %v777 = vrot.slane %v776, 4
      %v778 = vadd.f32 %v776, %v777
      %v779 = vrot.slane %v778, 2
      %v780 = vadd.f32 %v778, %v779
      %v781 = vrot.slane %v780, 1
      %v782 = vadd.f32 %v780, %v781
      %v783 = vmul.f32 %v782, %v526
      %v784 = vadd.f32 %v783, 1e-05
      %v785 = vrsqrt.pop %v784
      %v786 = vmul.f32 %v567, %v785
      %v787 = vmul.f32 %v769, %v786
      %v789 = vrot.slane %v787, 7
      %v791 = vsub.f32 %v567, %v789
      %v792 = vlaneseq
      %v793 = vshrl.u32 %v792, 7
      %v794 = vsub.s32 2, %v793
      %v795 = vrot.slane %v786, %v794
      %v796 = vmul.f32 %v758, %v795
      %v797 = vmul.f32 %v759, %v795
      %v798 = vlaneseq
      %v799 = vshrl.u32 %v798, 7
      %v800 = vsub.s32 3, %v799
      %v801 = vrot.slane %v791, %v800
      %v802 = vadd.f32 %v796, %v801
      %v803 = vadd.f32 %v797, %v801
      %s804 = scalar_lea.vmem %s306, 16
      %805 = vst.msk [vmem:[%s804] sm:$0xff] %vm324, %v802
      %806 = vst.msk [vmem:[%s804 + $0x8] sm:$0xff] %vm324, %v803
      %s807 = scalar_lea.vmem %s311, 16
      %808 = vst.msk [vmem:[%s807] sm:$0xff] %vm443, %v707
      %809 = vst.msk [vmem:[%s807 + $0x8] sm:$0xff] %vm443, %v708
      %s810 = scalar_lea.vmem %s5, 8
      %v811 = vld [vmem:[%s810] sm:$0xf]
      %v812 = vpack.c.bf16 %v803, %v802
      %v813 = vld [vmem:[%s4] sm:$0xf]
      %v815 = vsel %vm324, %v812, 0
      %v818 = vsel %vm328, %v813, 0
      %820 = vmatprep.subr.bf16.mxu0 0
      %821 = vmatpush1.bf16.msra.mxu0 %v818
      %822 = vmatprep.subr.bf16.mxu0 0
      %823 = vmatpush1.bf16.msra.mxu0 0
      %824 = vmatprep.subr.bf16.mxu0 0
      %825 = vmatpush1.bf16.msra.mxu0 0
      %826 = vmatprep.subr.bf16.mxu0 0
      %827 = vmatpush1.bf16.msra.mxu0 0
      %828 = vmatprep.subr.bf16.mxu0 0
      %829 = vmatpush1.bf16.msra.mxu0 0
      %830 = vmatprep.subr.bf16.mxu0 0
      %831 = vmatpush1.bf16.msra.mxu0 0
      %832 = vmatprep.subr.bf16.mxu0 0
      %833 = vmatpush1.bf16.msra.mxu0 0
      %834 = vmatprep.subr.bf16.mxu0 0
      %835 = vmatpush1.bf16.msra.mxu0 0
      %836 = vmatprep.subr.bf16.mxu0 0
      %837 = vmatpush1.bf16.msra.mxu0 0
      %838 = vmatprep.subr.bf16.mxu0 0
      %839 = vmatpush1.bf16.msra.mxu0 0
      %840 = vmatprep.subr.bf16.mxu0 0
      %841 = vmatpush1.bf16.msra.mxu0 0
      %842 = vmatprep.subr.bf16.mxu0 0
      %843 = vmatpush1.bf16.msra.mxu0 0
      %844 = vmatprep.subr.bf16.mxu0 0
      %845 = vmatpush1.bf16.msra.mxu0 0
      %846 = vmatprep.subr.bf16.mxu0 0
      %847 = vmatpush1.bf16.msra.mxu0 0
      %848 = vmatprep.subr.bf16.mxu0 0
      %849 = vmatpush1.bf16.msra.mxu0 0
      %850 = vmatprep.subr.bf16.mxu0 0
      %851 = vmatpush1.bf16.msra.mxu0 0
      %852 = vmatprep.mubr.bf16.mxu0 0
      %853 = vmatmul.mubr.bf16.gmra.mrb[0].mxu0 %v815
      %v854 = vpop.f32.mrb[0].mxu0
      %v855 = vadd.f32 0.0, %v854
      %v856 = vpop.f32.mrb[0].mxu0
      %v857 = vpop.f32.mrb[0].mxu0
      %v858 = vadd.f32 0.0, %v857
      %v859 = vpop.f32.mrb[0].mxu0
      %860 = vdwg.mxu0
      %v861 = vpack.c.bf16 %v811, %v811
      %v862 = vpack.c.bf16 %v858, %v855
      %v864 = vsel %vm324, %v861, 0
      %v867 = vsel %vm324, %v862, 0
      %869 = vmatprep.subr.bf16.mxu0 0
      %870 = vmatpush1.bf16.xpose.msra.mxu0 %v867
      %871 = vmatprep.subr.bf16.mxu0 0
      %872 = vmatpush1.bf16.xpose.msra.mxu0 0
      %873 = vmatprep.subr.bf16.mxu0 0
      %874 = vmatpush1.bf16.xpose.msra.mxu0 0
      %875 = vmatprep.subr.bf16.mxu0 0
      %876 = vmatpush1.bf16.xpose.msra.mxu0 0
      %877 = vmatprep.subr.bf16.mxu0 0
      %878 = vmatpush1.bf16.xpose.msra.mxu0 0
      %879 = vmatprep.subr.bf16.mxu0 0
      %880 = vmatpush1.bf16.xpose.msra.mxu0 0
      %881 = vmatprep.subr.bf16.mxu0 0
      %882 = vmatpush1.bf16.xpose.msra.mxu0 0
      %883 = vmatprep.subr.bf16.mxu0 0
      %884 = vmatpush1.bf16.xpose.msra.mxu0 0
      %885 = vmatprep.subr.bf16.mxu0 0
      %886 = vmatpush1.bf16.xpose.msra.mxu0 0
      %887 = vmatprep.subr.bf16.mxu0 0
      %888 = vmatpush1.bf16.xpose.msra.mxu0 0
      %889 = vmatprep.subr.bf16.mxu0 0
      %890 = vmatpush1.bf16.xpose.msra.mxu0 0
      %891 = vmatprep.subr.bf16.mxu0 0
      %892 = vmatpush1.bf16.xpose.msra.mxu0 0
      %893 = vmatprep.subr.bf16.mxu0 0
      %894 = vmatpush1.bf16.xpose.msra.mxu0 0
      %895 = vmatprep.subr.bf16.mxu0 0
      %896 = vmatpush1.bf16.xpose.msra.mxu0 0
      %897 = vmatprep.subr.bf16.mxu0 0
      %898 = vmatpush1.bf16.xpose.msra.mxu0 0
      %899 = vmatprep.subr.bf16.mxu0 0
      %900 = vmatpush1.bf16.xpose.msra.mxu0 0
      %901 = vmatprep.mubr.bf16.mxu0 0
      %902 = vmatmul.mubr.bf16.gmra.mrb[0].mxu0 %v864
      %v903 = vpop.f32.mrb[0].mxu0
      %v904 = vadd.f32 0.0, %v903
      %v905 = vpop.f32.mrb[0].mxu0
      %v906 = vpop.f32.mrb[0].mxu0
      %v907 = vpop.f32.mrb[0].mxu0
      %908 = vdwg.mxu0
      %910 = vset.pattern.permute.xlu0 8
      %911 = vperm.xlu0 %910, %v855
      %v912 = vpop.permute.xlu0 %911
      %915 = vset.pattern.permute.xlu0 8
      %916 = vperm.xlu0 %915, %v858
      %v917 = vpop.permute.xlu0 %916
      %v919 = vlaneseq
      %v920 = vshrl.u32 %v919, 7
      %v921 = vsub.s32 0, %v920
      %v922 = vrot.slane %v904, %v921
      %v923 = vadd.f32 %v912, %v922
      %v924 = vadd.f32 %v917, %v922
      %v925 = vmul.f32 %v923, 0.2
      %v926 = vmul.f32 %v924, 0.2
      %v927 = vmax.f32 %v923, %v925
      %v928 = vmax.f32 %v924, %v926
      %v929 = vadd.f32 %v927, %v317
      %v930 = vadd.f32 %v928, %v318
      %v931 = vsel %vm443, %v929, -inf
      %932 = vmax.xlane.f32.xlu0 %v931
      %v933 = vpop.xlane.xlu0 %932
      %v934 = vsel %vm443, %v930, -inf
      %935 = vmax.xlane.f32.xlu0 %v934
      %v936 = vpop.xlane.xlu0 %935
      %v937 = vsub.f32 %v929, %v933
      %v938 = vsub.f32 %v930, %v936
      %v939 = vmul.f32 %v937, 1.442695
      %v940 = vpow.pop %v939
      %v941 = vmul.f32 %v938, 1.442695
      %v942 = vpow.pop %v941
      %v943 = vsel %vm443, %v940, 0.0
      %944 = vadd.xlane.f32.xlu0 %v943
      %v945 = vpop.xlane.xlu0 %944
      %v946 = vsel %vm443, %v942, 0.0
      %947 = vadd.xlane.f32.xlu0 %v946
      %v948 = vpop.xlane.xlu0 %947
      %v949 = vrcp.pop %v945
      %v950 = vrcp.pop %v948
      %v951 = vmul.f32 %v940, %v949
      %v952 = vmul.f32 %v942, %v950
      %v953 = vpack.c.bf16 %v952, %v951
      %v954 = vlaneseq
      %v955 = vshrl.u32 %v954, 7
      %v956 = vsub.s32 1, %v955
      %v957 = vrot.slane %v811, %v956
      %v959 = vsel %vm443, %v953, 0
      %961 = vmatprep.subr.bf16.mxu0 0
      %962 = vmatpush1.bf16.msra.mxu0 %v862
      %963 = vmatprep.subr.bf16.mxu0 0
      %964 = vmatpush1.bf16.msra.mxu0 0
      %965 = vmatprep.subr.bf16.mxu0 0
      %966 = vmatpush1.bf16.msra.mxu0 0
      %967 = vmatprep.subr.bf16.mxu0 0
      %968 = vmatpush1.bf16.msra.mxu0 0
      %969 = vmatprep.subr.bf16.mxu0 0
      %970 = vmatpush1.bf16.msra.mxu0 0
      %971 = vmatprep.subr.bf16.mxu0 0
      %972 = vmatpush1.bf16.msra.mxu0 0
      %973 = vmatprep.subr.bf16.mxu0 0
      %974 = vmatpush1.bf16.msra.mxu0 0
      %975 = vmatprep.subr.bf16.mxu0 0
      %976 = vmatpush1.bf16.msra.mxu0 0
      %977 = vmatprep.subr.bf16.mxu0 0
      %978 = vmatpush1.bf16.msra.mxu0 0
      %979 = vmatprep.subr.bf16.mxu0 0
      %980 = vmatpush1.bf16.msra.mxu0 0
      %981 = vmatprep.subr.bf16.mxu0 0
      %982 = vmatpush1.bf16.msra.mxu0 0
      %983 = vmatprep.subr.bf16.mxu0 0
      %984 = vmatpush1.bf16.msra.mxu0 0
      %985 = vmatprep.subr.bf16.mxu0 0
      %986 = vmatpush1.bf16.msra.mxu0 0
      %987 = vmatprep.subr.bf16.mxu0 0
      %988 = vmatpush1.bf16.msra.mxu0 0
      %989 = vmatprep.subr.bf16.mxu0 0
      %990 = vmatpush1.bf16.msra.mxu0 0
      %991 = vmatprep.subr.bf16.mxu0 0
      %992 = vmatpush1.bf16.msra.mxu0 0
      %993 = vmatprep.mubr.bf16.mxu0 0
      %994 = vmatmul.mubr.bf16.gmra.mrb[0].mxu0 %v959
      %v995 = vpop.f32.mrb[0].mxu0
      %v996 = vadd.f32 %v957, %v995
      %v997 = vpop.f32.mrb[0].mxu0
      %v998 = vpop.f32.mrb[0].mxu0
      %v999 = vadd.f32 %v957, %v998
      %v1000 = vpop.f32.mrb[0].mxu0
      %1001 = vdwg.mxu0
      %v1002 = vmax.f32 %v996, 0.0
      %v1003 = vmax.f32 %v999, 0.0
      %v1004 = vsel %vm324, %v1002, 0.0
      %v1005 = vsel %vm324, %v1003, 0.0
      %v1006 = vadd.f32 %v1004, %v1005
      %v1007 = vrot.slane %v1006, 4
      %v1008 = vadd.f32 %v1006, %v1007
      %v1009 = vrot.slane %v1008, 2
      %v1010 = vadd.f32 %v1008, %v1009
      %v1011 = vrot.slane %v1010, 1
      %v1012 = vadd.f32 %v1010, %v1011
      %v1013 = vmul.f32 %v1012, %v526
      %v1014 = vsub.f32 %v1002, %v1013
      %v1015 = vsub.f32 %v1003, %v1013
      %v1016 = vmul.f32 %v1014, %v1014
      %v1017 = vmul.f32 %v1015, %v1015
      %v1018 = vsel %vm324, %v1016, 0.0
      %v1019 = vsel %vm324, %v1017, 0.0
      %v1020 = vadd.f32 %v1018, %v1019
      %v1021 = vrot.slane %v1020, 4
      %v1022 = vadd.f32 %v1020, %v1021
      %v1023 = vrot.slane %v1022, 2
      %v1024 = vadd.f32 %v1022, %v1023
      %v1025 = vrot.slane %v1024, 1
      %v1026 = vadd.f32 %v1024, %v1025
      %v1027 = vmul.f32 %v1026, %v526
      %v1028 = vadd.f32 %v1027, 1e-05
      %v1029 = vrsqrt.pop %v1028
      %v1030 = vmul.f32 %v811, %v1029
      %v1031 = vmul.f32 %v1013, %v1030
      %v1033 = vrot.slane %v1031, 7
      %v1035 = vsub.f32 %v811, %v1033
      %v1036 = vlaneseq
      %v1037 = vshrl.u32 %v1036, 7
      %v1038 = vsub.s32 2, %v1037
      %v1039 = vrot.slane %v1030, %v1038
      %v1040 = vmul.f32 %v1002, %v1039
      %v1041 = vmul.f32 %v1003, %v1039
      %v1042 = vlaneseq
      %v1043 = vshrl.u32 %v1042, 7
      %v1044 = vsub.s32 3, %v1043
      %v1045 = vrot.slane %v1035, %v1044
      %v1046 = vadd.f32 %v1040, %v1045
      %v1047 = vadd.f32 %v1041, %v1045
      %s1048 = scalar_lea.vmem %s306, 32
      %1049 = vst.msk [vmem:[%s1048] sm:$0xff] %vm324, %v1046
      %1050 = vst.msk [vmem:[%s1048 + $0x8] sm:$0xff] %vm324, %v1047
      %s1051 = scalar_lea.vmem %s311, 32
      %1052 = vst.msk [vmem:[%s1051] sm:$0xff] %vm443, %v951
      %1053 = vst.msk [vmem:[%s1051 + $0x8] sm:$0xff] %vm443, %v952
      %p1054 = scmp.lt.s32.totalorder %s19, 7
      %s1055 = scalar_select %p1054, %s19, 7
      %s1056 = smul.addr %s1055, 6
      %s1057 = smul.addr %s1056, 8
      %s1058 = scalar_lea.vmem %s6, %s1057
      %p1059 = scmp.lt.s32.totalorder %s19, 7
      %s1060 = scalar_select %p1059, %s19, 7
      %s1061 = smul.addr %s1060, 6
      %s1062 = smul.addr %s1061, 8
      %s1063 = scalar_lea.vmem %s7, %s1062
      // Predicated region
      $region45: #{graph_convolution_forward.1} parent=43 // pred_check
        %p1064 = pneg %p173
      $region46: #{graph_convolution_forward.1} parent=43 // pred_check_branch
        %1066 = sbr.rel (%p1064) target = $region48
      $region47: #{graph_convolution_forward.1} parent=43 // pred_region
        _
      $region48: #{graph_convolution_forward.1} parent=43 // pred_fallthru
        _
      // Predicated region
      $region49: #{graph_convolution_forward.1} parent=43 // pred_check
        %p1067 = pneg %p199
      $region50: #{graph_convolution_forward.1} parent=43 // pred_check_branch
        %1069 = sbr.rel (%p1067) target = $region52
      $region51: #{graph_convolution_forward.1} parent=43 // pred_region
        _
      $region52: #{graph_convolution_forward.1} parent=43 // pred_fallthru
        _
    $region44: #{graph_convolution_forward.1} parent=5 // pred_fallthru
      _
    %p1070 = scmp.le.s32.totalorder 2, %s14
    // Predicated region
    $region53: #{graph_convolution_forward.1} parent=5 // pred_check
      %p1071 = pneg %p1070
    $region54: #{graph_convolution_forward.1} parent=5 // pred_check_branch
      %1073 = sbr.rel (%p1071) target = $region56
    $region55: #{graph_convolution_forward.1} parent=5 // pred_region
      %s1074 = ssub.s32 %s14, 2
      // Predicated region
      $region57: #{graph_convolution_forward.1} parent=55 // pred_check
        %p1075 = pneg %p179
      $region58: #{graph_convolution_forward.1} parent=55 // pred_check_branch
        %1077 = sbr.rel (%p1075) target = $region60
      $region59: #{graph_convolution_forward.1} parent=55 // pred_region
        %p1078 = scmp.lt.s32.totalorder %s20, 7
        %s1079 = scalar_select %p1078, %s20, 7
        %s1080 = smul.addr %s1079, 6
        %s1081 = smul.addr %s1080, 8
        %s1082 = scalar_lea.vmem %s6, %s1081
      $region60: #{graph_convolution_forward.1} parent=55 // pred_fallthru
        _
      // Predicated region
      $region61: #{graph_convolution_forward.1} parent=55 // pred_check
        %p1083 = pneg %p205
      $region62: #{graph_convolution_forward.1} parent=55 // pred_check_branch
        %1085 = sbr.rel (%p1083) target = $region64
      $region63: #{graph_convolution_forward.1} parent=55 // pred_region
        %p1086 = scmp.lt.s32.totalorder %s20, 7
        %s1087 = scalar_select %p1086, %s20, 7
        %s1088 = smul.addr %s1087, 6
        %s1089 = smul.addr %s1088, 8
        %s1090 = scalar_lea.vmem %s7, %s1089
      $region64: #{graph_convolution_forward.1} parent=55 // pred_fallthru
        _
    $region56: #{graph_convolution_forward.1} parent=5 // pred_fallthru
      _
  $region6: #{graph_convolution_forward.1} parent=0 // loop_footer
    %s18 = sadd.s32 1, %s14
  $region7: #{graph_convolution_forward.1} parent=0 // loop_footer_branch
    %13 = sbr.rel target = $region3
  $region8: #{graph_convolution_forward.1} parent=0 // loop_exit
    _

</llo_original>
